<compile_context>
chip_gen: v6e
topology: v6e:2x2x1
jax: 0.10.0
libtpu: 0.0.40
codegen_flags: <defaults>
</compile_context>

<pallas_src>
import functools

import jax
import jax.numpy as jnp
from jax.experimental import pallas as pl
from jax.experimental.pallas import tpu as pltpu


_TM_MAX = 131072            # max flattened rows (lanes) per grid step; mult of 128
_SMALL_M = 16384            # below this the fused XLA path beats pad+transpose+pallas
_VMEM_LIMIT = 32 * 1024 * 1024


def _round_up(n, k):
    return ((n + k - 1) // k) * k


def _choose_tiles(m_pad0):
    """Pick (num_tiles, tile_lanes) for a 128-aligned flattened extent."""
    n = pl.cdiv(m_pad0, _TM_MAX)
    # v7x megacore: >= 2 equal steps so both TensorCores get balanced work.
    if m_pad0 >= 65536:
        n = max(n, 2)
        if n % 2:
            n += 1
    tm = _round_up(pl.cdiv(m_pad0, n), 128)
    return n, tm


def _linear_relu_kernel(w_ref, b_ref, xt_ref, ot_ref):
    # w_ref: (C_OUT, C_IN) resident, b_ref: (C_OUT, 1) resident,
    # xt_ref: (C_IN, TM), ot_ref: (C_OUT, TM).  M is on the lane axis.
    w = w_ref[...].astype(jnp.float32)
    x = xt_ref[...].astype(jnp.float32)
    acc = b_ref[...].astype(jnp.float32)            # (C_OUT, 1) lane-broadcast on use
    for k in range(x.shape[0]):                     # K=3 unrolled VPU mul/adds (no MXU)
        # (C_OUT,1) * (1,TM) -> (C_OUT,TM); sublane/lane broadcasts stay off HBM path.
        acc = acc + w[:, k:k + 1] * x[k:k + 1, :]
    ot_ref[...] = jnp.maximum(acc, 0.0).astype(ot_ref.dtype)


def _linear_add_relu_kernel(w_ref, b_ref, xt_ref, other_ref, ot_ref):
    w = w_ref[...].astype(jnp.float32)
    x = xt_ref[...].astype(jnp.float32)
    acc = b_ref[...].astype(jnp.float32) + other_ref[...].astype(jnp.float32)
    for k in range(x.shape[0]):
        acc = acc + w[:, k:k + 1] * x[k:k + 1, :]
    ot_ref[...] = jnp.maximum(acc, 0.0).astype(ot_ref.dtype)


def _foldable_into_bias(other, out_f, out_ndim):
    """True iff `other` has no extent along the flattened-M dims."""
    s = other.shape
    if len(s) > out_ndim:
        return False
    if any(d != 1 for d in s[:-1]):
        return False
    return len(s) == 0 or s[-1] in (1, out_f)


def _xla_forward(x, weight, bias, other):
    v = jnp.einsum("...k,ok->...o", x, weight) + bias
    if other is not None:
        v = v + other
    return jnp.maximum(v, 0.0).astype(x.dtype)


def _pallas_forward(x, weight, bias, other):
    out_f, in_f = weight.shape
    lead = x.shape[:-1]
    m = 1
    for d in lead:
        m *= d

    b2 = bias.reshape(out_f, 1).astype(jnp.float32)
    # Fold an M-invariant `other` (scalar / per-channel) into the bias so we never
    # fabricate and stream a full (out_f, M) residual tensor.
    if other is not None and _foldable_into_bias(other, out_f, len(lead) + 1):
        extra = jnp.broadcast_to(jnp.reshape(other, (-1,)).astype(jnp.float32), (out_f,))
        b2 = b2 + extra.reshape(out_f, 1)
        other = None

    m_pad0 = _round_up(max(m, 1), 128)
    n_tiles, tm = _choose_tiles(m_pad0)
    m_total = n_tiles * tm                         # bounded padding (<~1% waste)

    x2 = x.reshape(m, in_f)
    if m_total != m:
        x2 = jnp.pad(x2, ((0, m_total - m), (0, 0)))
    xt = x2.T                                      # (in_f, m_total), lane-dense

    const_spec = lambda shape: pl.BlockSpec(shape, lambda i: (0, 0))
    x_spec = pl.BlockSpec((in_f, tm), lambda i: (0, i))
    o_spec = pl.BlockSpec((out_f, tm), lambda i: (0, i))
    out_shape = jax.ShapeDtypeStruct((out_f, m_total), x.dtype)

    cparams = pltpu.CompilerParams(
        dimension_semantics=("parallel",),
        vmem_limit_bytes=_VMEM_LIMIT,
    )
    n_out_streams = 1 if other is None else 2
    cost = pl.CostEstimate(
        flops=m_total * out_f * (2 * in_f + 2),
        transcendentals=0,
        bytes_accessed=4 * m_total * (in_f + (1 + n_out_streams) * out_f),
    )

    if other is None:
        out_t = pl.pallas_call(
            _linear_relu_kernel,
            out_shape=out_shape,
            grid_spec=pltpu.PrefetchScalarGridSpec(
                num_scalar_prefetch=0,
                grid=(n_tiles,),
                in_specs=[const_spec((out_f, in_f)),
                          const_spec((out_f, 1)),
                          x_spec],
                out_specs=o_spec,
            ),
            compiler_params=cparams,
            cost_estimate=cost,
        )(weight, b2, xt)
    else:
        ofull = jnp.broadcast_to(other, lead + (out_f,)).astype(x.dtype)
        o2 = ofull.reshape(m, out_f)
        if m_total != m:
            o2 = jnp.pad(o2, ((0, m_total - m), (0, 0)))
        ot = o2.T                                   # (out_f, m_total), lane-dense
        out_t = pl.pallas_call(
            _linear_add_relu_kernel,
            out_shape=out_shape,
            grid_spec=pltpu.PrefetchScalarGridSpec(
                num_scalar_prefetch=0,
                grid=(n_tiles,),
                in_specs=[const_spec((out_f, in_f)),
                          const_spec((out_f, 1)),
                          x_spec,
                          o_spec],
                out_specs=o_spec,
            ),
            compiler_params=cparams,
            cost_estimate=cost,
        )(weight, b2, xt, ot)

    out2 = out_t[:, :m].T                           # drop lane padding, back to row-major
    return out2.reshape(*lead, out_f)


@functools.partial(jax.jit, static_argnames=("force_pallas",))
def model_forward(x, weight, bias, other=None, *, force_pallas=False):
    """relu(x @ weight.T + bias [+ other]) over the last axis of x."""
    out_f, in_f = weight.shape
    assert x.shape[-1] == in_f
    m = 1
    for d in x.shape[:-1]:
        m *= d
    if not force_pallas and m < _SMALL_M:
        # Tiny-M fast path: launch + layout plumbing dominate any kernel win.
        return _xla_forward(x, weight, bias, other)
    return _pallas_forward(x, weight, bias, other)


def _reference(x, weight, bias, other=None):
    v = jnp.einsum("...k,ok->...o", x, weight) + bias
    if other is not None:
        v = v + other
    return jnp.maximum(v, 0.0)


if __name__ == "__main__":
    key = jax.random.PRNGKey(0)
    kx, kw, kb, ko, kc = jax.random.split(key, 5)

    # Small shapes consistent with the module: Linear(3 -> 8) on the last axis.
    B, H, W, C_IN, C_OUT = 2, 64, 64, 3, 8          # flattened M = 8192
    x = jax.random.normal(kx, (B, H, W, C_IN), dtype=jnp.float32)
    weight = jax.random.normal(kw, (C_OUT, C_IN), dtype=jnp.float32) * 0.1
    bias = jax.random.normal(kb, (C_OUT,), dtype=jnp.float32) * 0.1
    other_full = jax.random.normal(ko, (B, H, W, C_OUT), dtype=jnp.float32)
    other_chan = jax.random.normal(kc, (C_OUT,), dtype=jnp.float32)

    # 1) Pallas kernel, no residual.
    out = jax.block_until_ready(model_forward(x, weight, bias, force_pallas=True))
    assert out.shape == (B, H, W, C_OUT)
    assert jnp.allclose(out, _reference(x, weight, bias), atol=1e-5, rtol=1e-5)

    # 2) Pallas kernel, full-tensor residual (streams its own lane-dense slab).
    out = jax.block_until_ready(
        model_forward(x, weight, bias, other_full, force_pallas=True))
    assert jnp.allclose(out, _reference(x, weight, bias, other_full),
                        atol=1e-5, rtol=1e-5)

    # 3) Pallas kernel, per-channel residual (folded into bias; no extra stream).
    out = jax.block_until_ready(
        model_forward(x, weight, bias, other_chan, force_pallas=True))
    assert jnp.allclose(out, _reference(x, weight, bias, other_chan),
                        atol=1e-5, rtol=1e-5)

    # 4) Multi-tile grid (2 balanced steps -> exercises pipelining / megacore split).
    x_big = jax.random.normal(kx, (1, 512, 256, C_IN), dtype=jnp.float32)
    out = jax.block_until_ready(model_forward(x_big, weight, bias, force_pallas=True))
    assert out.shape == (1, 512, 256, C_OUT)
    assert jnp.allclose(out, _reference(x_big, weight, bias), atol=1e-5, rtol=1e-5)

    # 5) Small-M auto path (fused XLA fast path).
    out = jax.block_until_ready(model_forward(x, weight, bias, other_full))
    assert jnp.allclose(out, _reference(x, weight, bias, other_full),
                        atol=1e-5, rtol=1e-5)

    print("KERNEL_OK")
</pallas_src>

<mosaic_0001>
module attributes {stable_mosaic.version = 11 : i64} {
  func.func @_linear_relu_kernel(%arg0: i32, %arg1: memref<8x3xf32, #tpu.memory_space<vmem>>, %arg2: memref<8x1xf32, #tpu.memory_space<vmem>>, %arg3: memref<3x8192xf32, #tpu.memory_space<vmem>>, %arg4: memref<8x8192xf32, #tpu.memory_space<vmem>>) attributes {dimension_semantics = [#tpu.dimension_semantics<parallel>], iteration_bounds = array<i64: 1>, scalar_prefetch = 0 : i64, scratch_operands = 0 : i64, tpu.core_type = #tpu.core_type<tc>, window_params = [{pipeline_mode = #tpu.pipeline_mode<synchronous>, transform_indices = @transform_0, window_bounds = array<i64: 8, 3>}, {pipeline_mode = #tpu.pipeline_mode<synchronous>, transform_indices = @transform_1, window_bounds = array<i64: 8, 1>}, {transform_indices = @transform_2, window_bounds = array<i64: 3, 8192>}, {transform_indices = @transform_3, window_bounds = array<i64: 8, 8192>}]} {
    %c0 = arith.constant 0 : index
    %c0_0 = arith.constant 0 : index
    %0 = vector.load %arg1[%c0, %c0_0] : memref<8x3xf32, #tpu.memory_space<vmem>>, vector<8x3xf32>
    %c0_1 = arith.constant 0 : index
    %c0_2 = arith.constant 0 : index
    %1 = vector.load %arg3[%c0_1, %c0_2] : memref<3x8192xf32, #tpu.memory_space<vmem>>, vector<3x8192xf32>
    %c0_3 = arith.constant 0 : index
    %c0_4 = arith.constant 0 : index
    %2 = vector.load %arg2[%c0_3, %c0_4] : memref<8x1xf32, #tpu.memory_space<vmem>>, vector<8x1xf32>
    %3 = vector.extract_strided_slice %0 {offsets = [0, 0], sizes = [8, 1], strides = [1, 1]} : vector<8x3xf32> to vector<8x1xf32>
    %4 = vector.extract_strided_slice %1 {offsets = [0, 0], sizes = [1, 8192], strides = [1, 1]} : vector<3x8192xf32> to vector<1x8192xf32>
    %5 = vector.broadcast %3 : vector<8x1xf32> to vector<8x8192xf32>
    %6 = vector.broadcast %4 : vector<1x8192xf32> to vector<8x8192xf32>
    %7 = arith.mulf %5, %6 : vector<8x8192xf32>
    %8 = vector.broadcast %2 : vector<8x1xf32> to vector<8x8192xf32>
    %9 = arith.addf %8, %7 : vector<8x8192xf32>
    %10 = vector.extract_strided_slice %0 {offsets = [0, 1], sizes = [8, 1], strides = [1, 1]} : vector<8x3xf32> to vector<8x1xf32>
    %11 = vector.extract_strided_slice %1 {offsets = [1, 0], sizes = [1, 8192], strides = [1, 1]} : vector<3x8192xf32> to vector<1x8192xf32>
    %12 = vector.broadcast %10 : vector<8x1xf32> to vector<8x8192xf32>
    %13 = vector.broadcast %11 : vector<1x8192xf32> to vector<8x8192xf32>
    %14 = arith.mulf %12, %13 : vector<8x8192xf32>
    %15 = arith.addf %9, %14 : vector<8x8192xf32>
    %16 = vector.extract_strided_slice %0 {offsets = [0, 2], sizes = [8, 1], strides = [1, 1]} : vector<8x3xf32> to vector<8x1xf32>
    %17 = vector.extract_strided_slice %1 {offsets = [2, 0], sizes = [1, 8192], strides = [1, 1]} : vector<3x8192xf32> to vector<1x8192xf32>
    %18 = vector.broadcast %16 : vector<8x1xf32> to vector<8x8192xf32>
    %19 = vector.broadcast %17 : vector<1x8192xf32> to vector<8x8192xf32>
    %20 = arith.mulf %18, %19 : vector<8x8192xf32>
    %21 = arith.addf %15, %20 : vector<8x8192xf32>
    %cst = arith.constant 0.000000e+00 : f32
    %22 = vector.broadcast %cst : f32 to vector<8x8192xf32>
    %23 = arith.maximumf %21, %22 : vector<8x8192xf32>
    %c0_5 = arith.constant 0 : index
    %c0_6 = arith.constant 0 : index
    %24 = vector.load %arg4[%c0_5, %c0_6] : memref<8x8192xf32, #tpu.memory_space<vmem>>, vector<8x8192xf32>
    tpu.vector_store %arg4[%c0_5, %c0_6], %23 {strides = array<i32>} : memref<8x8192xf32, #tpu.memory_space<vmem>>, vector<8x8192xf32>,
    return
  }
  func.func @transform_0(%arg0: i32) -> (i32, i32) {
    %c0_i32 = arith.constant 0 : i32
    %c0_i32_0 = arith.constant 0 : i32
    %c0_i32_1 = arith.constant 0 : i32
    return %c0_i32, %c0_i32_0 : i32, i32
  }
  func.func @transform_1(%arg0: i32) -> (i32, i32) {
    %c0_i32 = arith.constant 0 : i32
    %c0_i32_0 = arith.constant 0 : i32
    %c0_i32_1 = arith.constant 0 : i32
    return %c0_i32, %c0_i32_0 : i32, i32
  }
  func.func @transform_2(%arg0: i32) -> (i32, i32) {
    %c0_i32 = arith.constant 0 : i32
    %c0_i32_0 = arith.constant 0 : i32
    return %c0_i32, %arg0 : i32, i32
  }
  func.func @transform_3(%arg0: i32) -> (i32, i32) {
    %c0_i32 = arith.constant 0 : i32
    %c0_i32_0 = arith.constant 0 : i32
    return %c0_i32, %arg0 : i32, i32
  }
}

</mosaic_0001>

<llo_original>
// kernel: model_forward.1
$region0: #{model_forward.1}
  #allocation0 [shape = 'u32[]', space=smem, size = 0x4, offset = 0x4, fixed_abs, tag = 'smem constant byte address 0x4 - core index']
  #allocation1 [shape = 'u32[144,128]{1,0:T(1,128)}', space=vmem, size = 0x12000, scoped, tag = 'internal scratch']
  %s0 = inlined_call_operand.vmem [shape: f32[8,3], index: 0, kind: input, shape index: {}]
  %s1 = inlined_call_operand.vmem [shape: f32[8,1], index: 1, kind: input, shape index: {}]
  %s2 = inlined_call_operand.vmem [shape: f32[3,8192], index: 2, kind: input, shape index: {}]
  %s3 = inlined_call_operand.vmem [shape: f32[8,8192], index: 3, kind: output, shape index: {}]
  %s4 = sld [smem:[#allocation0]]
  $region22: #{model_forward.1} parent=0
    _
  %s6 = ssub.s32 1, %s4
  %s7 = scalar_select 0, %s6, %s4
  // Predicated region
  $region2: #{model_forward.1} parent=0 // pred_check
    _
  $region3: #{model_forward.1} parent=0 // pred_check_branch
    %9 = sbr.rel (0) target = $region5
  $region4: #{model_forward.1} parent=0 // pred_region
    _
  $region5: #{model_forward.1} parent=0 // pred_fallthru
    _
  // Predicated region
  $region6: #{model_forward.1} parent=0 // pred_check
    _
  $region7: #{model_forward.1} parent=0 // pred_check_branch
    %11 = sbr.rel (0) target = $region9
  $region8: #{model_forward.1} parent=0 // pred_region
    _
  $region9: #{model_forward.1} parent=0 // pred_fallthru
    _
  // Predicated region
  $region10: #{model_forward.1} parent=0 // pred_check
    _
  $region11: #{model_forward.1} parent=0 // pred_check_branch
    %13 = sbr.rel (0) target = $region13
  $region12: #{model_forward.1} parent=0 // pred_region
    _
  $region13: #{model_forward.1} parent=0 // pred_fallthru
    _
  %v14 = vld [vmem:[%s0] sm:$0xff]
  %v15 = vld [vmem:[%s2] sm:$0x77]
  %v16 = vld [vmem:[%s2 + $0x8] sm:$0x77]
  %v17 = vld [vmem:[%s2 + $0x10] sm:$0x77]
  %v18 = vld [vmem:[%s2 + $0x18] sm:$0x77]
  %v19 = vld [vmem:[%s2 + $0x20] sm:$0x77]
  %v20 = vld [vmem:[%s2 + $0x28] sm:$0x77]
  %v21 = vld [vmem:[%s2 + $0x30] sm:$0x77]
  %v22 = vld [vmem:[%s2 + $0x38] sm:$0x77]
  %v23 = vld [vmem:[%s2 + $0x40] sm:$0x77]
  %v24 = vld [vmem:[%s2 + $0x48] sm:$0x77]
  %v25 = vld [vmem:[%s2 + $0x50] sm:$0x77]
  %v26 = vld [vmem:[%s2 + $0x58] sm:$0x77]
  %v27 = vld [vmem:[%s2 + $0x60] sm:$0x77]
  %v28 = vld [vmem:[%s2 + $0x68] sm:$0x77]
  %v29 = vld [vmem:[%s2 + $0x70] sm:$0x77]
  %v30 = vld [vmem:[%s2 + $0x78] sm:$0x77]
  %v31 = vld [vmem:[%s2 + $0x80] sm:$0x77]
  %v32 = vld [vmem:[%s2 + $0x88] sm:$0x77]
  %v33 = vld [vmem:[%s2 + $0x90] sm:$0x77]
  %v34 = vld [vmem:[%s2 + $0x98] sm:$0x77]
  %v35 = vld [vmem:[%s2 + $0xa0] sm:$0x77]
  %v36 = vld [vmem:[%s2 + $0xa8] sm:$0x77]
  %v37 = vld [vmem:[%s2 + $0xb0] sm:$0x77]
  %v38 = vld [vmem:[%s2 + $0xb8] sm:$0x77]
  %v39 = vld [vmem:[%s2 + $0xc0] sm:$0x77]
  %v40 = vld [vmem:[%s2 + $0xc8] sm:$0x77]
  %v41 = vld [vmem:[%s2 + $0xd0] sm:$0x77]
  %v42 = vld [vmem:[%s2 + $0xd8] sm:$0x77]
  %v43 = vld [vmem:[%s2 + $0xe0] sm:$0x77]
  %v44 = vld [vmem:[%s2 + $0xe8] sm:$0x77]
  %v45 = vld [vmem:[%s2 + $0xf0] sm:$0x77]
  %v46 = vld [vmem:[%s2 + $0xf8] sm:$0x77]
  %v47 = vld [vmem:[%s1] sm:$0xff]
  %49 = vset.pattern.permute.xlu0 0
  %50 = vperm.xlu0 %49, %v14
  %v51 = vpop.permute.xlu0 %50
  %v85 = vlaneseq
  %v86 = vshrl.u32 %v85, 7
  %v87 = vsub.s32 0, %v86
  %v88 = vrot.slane %v15, %v87
  %v89 = vlaneseq
  %v90 = vshrl.u32 %v89, 7
  %v91 = vsub.s32 4, %v90
  %v92 = vrot.slane %v15, %v91
  %v93 = vlaneseq
  %v94 = vshrl.u32 %v93, 7
  %v95 = vsub.s32 0, %v94
  %v96 = vrot.slane %v16, %v95
  %v97 = vlaneseq
  %v98 = vshrl.u32 %v97, 7
  %v99 = vsub.s32 4, %v98
  %v100 = vrot.slane %v16, %v99
  %v101 = vlaneseq
  %v102 = vshrl.u32 %v101, 7
  %v103 = vsub.s32 0, %v102
  %v104 = vrot.slane %v17, %v103
  %v105 = vlaneseq
  %v106 = vshrl.u32 %v105, 7
  %v107 = vsub.s32 4, %v106
  %v108 = vrot.slane %v17, %v107
  %v109 = vlaneseq
  %v110 = vshrl.u32 %v109, 7
  %v111 = vsub.s32 0, %v110
  %v112 = vrot.slane %v18, %v111
  %v113 = vlaneseq
  %v114 = vshrl.u32 %v113, 7
  %v115 = vsub.s32 4, %v114
  %v116 = vrot.slane %v18, %v115
  %v117 = vlaneseq
  %v118 = vshrl.u32 %v117, 7
  %v119 = vsub.s32 0, %v118
  %v120 = vrot.slane %v19, %v119
  %v121 = vlaneseq
  %v122 = vshrl.u32 %v121, 7
  %v123 = vsub.s32 4, %v122
  %v124 = vrot.slane %v19, %v123
  %v125 = vlaneseq
  %v126 = vshrl.u32 %v125, 7
  %v127 = vsub.s32 0, %v126
  %v128 = vrot.slane %v20, %v127
  %v129 = vlaneseq
  %v130 = vshrl.u32 %v129, 7
  %v131 = vsub.s32 4, %v130
  %v132 = vrot.slane %v20, %v131
  %v133 = vlaneseq
  %v134 = vshrl.u32 %v133, 7
  %v135 = vsub.s32 0, %v134
  %v136 = vrot.slane %v21, %v135
  %v137 = vlaneseq
  %v138 = vshrl.u32 %v137, 7
  %v139 = vsub.s32 4, %v138
  %v140 = vrot.slane %v21, %v139
  %v141 = vlaneseq
  %v142 = vshrl.u32 %v141, 7
  %v143 = vsub.s32 0, %v142
  %v144 = vrot.slane %v22, %v143
  %v145 = vlaneseq
  %v146 = vshrl.u32 %v145, 7
  %v147 = vsub.s32 4, %v146
  %v148 = vrot.slane %v22, %v147
  %v149 = vlaneseq
  %v150 = vshrl.u32 %v149, 7
  %v151 = vsub.s32 0, %v150
  %v152 = vrot.slane %v23, %v151
  %v153 = vlaneseq
  %v154 = vshrl.u32 %v153, 7
  %v155 = vsub.s32 4, %v154
  %v156 = vrot.slane %v23, %v155
  %v157 = vlaneseq
  %v158 = vshrl.u32 %v157, 7
  %v159 = vsub.s32 0, %v158
  %v160 = vrot.slane %v24, %v159
  %v161 = vlaneseq
  %v162 = vshrl.u32 %v161, 7
  %v163 = vsub.s32 4, %v162
  %v164 = vrot.slane %v24, %v163
  %v165 = vlaneseq
  %v166 = vshrl.u32 %v165, 7
  %v167 = vsub.s32 0, %v166
  %v168 = vrot.slane %v25, %v167
  %v169 = vlaneseq
  %v170 = vshrl.u32 %v169, 7
  %v171 = vsub.s32 4, %v170
  %v172 = vrot.slane %v25, %v171
  %v173 = vlaneseq
  %v174 = vshrl.u32 %v173, 7
  %v175 = vsub.s32 0, %v174
  %v176 = vrot.slane %v26, %v175
  %v177 = vlaneseq
  %v178 = vshrl.u32 %v177, 7
  %v179 = vsub.s32 4, %v178
  %v180 = vrot.slane %v26, %v179
  %v181 = vlaneseq
  %v182 = vshrl.u32 %v181, 7
  %v183 = vsub.s32 0, %v182
  %v184 = vrot.slane %v27, %v183
  %v185 = vlaneseq
  %v186 = vshrl.u32 %v185, 7
  %v187 = vsub.s32 4, %v186
  %v188 = vrot.slane %v27, %v187
  %v189 = vlaneseq
  %v190 = vshrl.u32 %v189, 7
  %v191 = vsub.s32 0, %v190
  %v192 = vrot.slane %v28, %v191
  %v193 = vlaneseq
  %v194 = vshrl.u32 %v193, 7
  %v195 = vsub.s32 4, %v194
  %v196 = vrot.slane %v28, %v195
  %v197 = vlaneseq
  %v198 = vshrl.u32 %v197, 7
  %v199 = vsub.s32 0, %v198
  %v200 = vrot.slane %v29, %v199
  %v201 = vlaneseq
  %v202 = vshrl.u32 %v201, 7
  %v203 = vsub.s32 4, %v202
  %v204 = vrot.slane %v29, %v203
  %v205 = vlaneseq
  %v206 = vshrl.u32 %v205, 7
  %v207 = vsub.s32 0, %v206
  %v208 = vrot.slane %v30, %v207
  %v209 = vlaneseq
  %v210 = vshrl.u32 %v209, 7
  %v211 = vsub.s32 4, %v210
  %v212 = vrot.slane %v30, %v211
  %v213 = vlaneseq
  %v214 = vshrl.u32 %v213, 7
  %v215 = vsub.s32 0, %v214
  %v216 = vrot.slane %v31, %v215
  %v217 = vlaneseq
  %v218 = vshrl.u32 %v217, 7
  %v219 = vsub.s32 4, %v218
  %v220 = vrot.slane %v31, %v219
  %v221 = vlaneseq
  %v222 = vshrl.u32 %v221, 7
  %v223 = vsub.s32 0, %v222
  %v224 = vrot.slane %v32, %v223
  %v225 = vlaneseq
  %v226 = vshrl.u32 %v225, 7
  %v227 = vsub.s32 4, %v226
  %v228 = vrot.slane %v32, %v227
  %v229 = vlaneseq
  %v230 = vshrl.u32 %v229, 7
  %v231 = vsub.s32 0, %v230
  %v232 = vrot.slane %v33, %v231
  %v233 = vlaneseq
  %v234 = vshrl.u32 %v233, 7
  %v235 = vsub.s32 4, %v234
  %v236 = vrot.slane %v33, %v235
  %v237 = vlaneseq
  %v238 = vshrl.u32 %v237, 7
  %v239 = vsub.s32 0, %v238
  %v240 = vrot.slane %v34, %v239
  %v241 = vlaneseq
  %v242 = vshrl.u32 %v241, 7
  %v243 = vsub.s32 4, %v242
  %v244 = vrot.slane %v34, %v243
  %v245 = vlaneseq
  %v246 = vshrl.u32 %v245, 7
  %v247 = vsub.s32 0, %v246
  %v248 = vrot.slane %v35, %v247
  %v249 = vlaneseq
  %v250 = vshrl.u32 %v249, 7
  %v251 = vsub.s32 4, %v250
  %v252 = vrot.slane %v35, %v251
  %v253 = vlaneseq
  %v254 = vshrl.u32 %v253, 7
  %v255 = vsub.s32 0, %v254
  %v256 = vrot.slane %v36, %v255
  %v257 = vlaneseq
  %v258 = vshrl.u32 %v257, 7
  %v259 = vsub.s32 4, %v258
  %v260 = vrot.slane %v36, %v259
  %v261 = vlaneseq
  %v262 = vshrl.u32 %v261, 7
  %v263 = vsub.s32 0, %v262
  %v264 = vrot.slane %v37, %v263
  %v265 = vlaneseq
  %v266 = vshrl.u32 %v265, 7
  %v267 = vsub.s32 4, %v266
  %v268 = vrot.slane %v37, %v267
  %v269 = vlaneseq
  %v270 = vshrl.u32 %v269, 7
  %v271 = vsub.s32 0, %v270
  %v272 = vrot.slane %v38, %v271
  %v273 = vlaneseq
  %v274 = vshrl.u32 %v273, 7
  %v275 = vsub.s32 4, %v274
  %v276 = vrot.slane %v38, %v275
  %v277 = vlaneseq
  %v278 = vshrl.u32 %v277, 7
  %v279 = vsub.s32 0, %v278
  %v280 = vrot.slane %v39, %v279
  %v281 = vlaneseq
  %v282 = vshrl.u32 %v281, 7
  %v283 = vsub.s32 4, %v282
  %v284 = vrot.slane %v39, %v283
  %v285 = vlaneseq
  %v286 = vshrl.u32 %v285, 7
  %v287 = vsub.s32 0, %v286
  %v288 = vrot.slane %v40, %v287
  %v289 = vlaneseq
  %v290 = vshrl.u32 %v289, 7
  %v291 = vsub.s32 4, %v290
  %v292 = vrot.slane %v40, %v291
  %v293 = vlaneseq
  %v294 = vshrl.u32 %v293, 7
  %v295 = vsub.s32 0, %v294
  %v296 = vrot.slane %v41, %v295
  %v297 = vlaneseq
  %v298 = vshrl.u32 %v297, 7
  %v299 = vsub.s32 4, %v298
  %v300 = vrot.slane %v41, %v299
  %v301 = vlaneseq
  %v302 = vshrl.u32 %v301, 7
  %v303 = vsub.s32 0, %v302
  %v304 = vrot.slane %v42, %v303
  %v305 = vlaneseq
  %v306 = vshrl.u32 %v305, 7
  %v307 = vsub.s32 4, %v306
  %v308 = vrot.slane %v42, %v307
  %v309 = vlaneseq
  %v310 = vshrl.u32 %v309, 7
  %v311 = vsub.s32 0, %v310
  %v312 = vrot.slane %v43, %v311
  %v313 = vlaneseq
  %v314 = vshrl.u32 %v313, 7
  %v315 = vsub.s32 4, %v314
  %v316 = vrot.slane %v43, %v315
  %v317 = vlaneseq
  %v318 = vshrl.u32 %v317, 7
  %v319 = vsub.s32 0, %v318
  %v320 = vrot.slane %v44, %v319
  %v321 = vlaneseq
  %v322 = vshrl.u32 %v321, 7
  %v323 = vsub.s32 4, %v322
  %v324 = vrot.slane %v44, %v323
  %v325 = vlaneseq
  %v326 = vshrl.u32 %v325, 7
  %v327 = vsub.s32 0, %v326
  %v328 = vrot.slane %v45, %v327
  %v329 = vlaneseq
  %v330 = vshrl.u32 %v329, 7
  %v331 = vsub.s32 4, %v330
  %v332 = vrot.slane %v45, %v331
  %v333 = vlaneseq
  %v334 = vshrl.u32 %v333, 7
  %v335 = vsub.s32 0, %v334
  %v336 = vrot.slane %v46, %v335
  %v337 = vlaneseq
  %v338 = vshrl.u32 %v337, 7
  %v339 = vsub.s32 4, %v338
  %v340 = vrot.slane %v46, %v339
  %v405 = vlaneseq
  %v406 = vshrl.u32 %v405, 7
  %v407 = vsub.s32 0, %v406
  %v408 = vrot.slane %v88, %v407
  %v409 = vlaneseq
  %v410 = vshrl.u32 %v409, 7
  %v411 = vsub.s32 0, %v410
  %v412 = vrot.slane %v92, %v411
  %v413 = vlaneseq
  %v414 = vshrl.u32 %v413, 7
  %v415 = vsub.s32 0, %v414
  %v416 = vrot.slane %v96, %v415
  %v417 = vlaneseq
  %v418 = vshrl.u32 %v417, 7
  %v419 = vsub.s32 0, %v418
  %v420 = vrot.slane %v100, %v419
  %v421 = vlaneseq
  %v422 = vshrl.u32 %v421, 7
  %v423 = vsub.s32 0, %v422
  %v424 = vrot.slane %v104, %v423
  %v425 = vlaneseq
  %v426 = vshrl.u32 %v425, 7
  %v427 = vsub.s32 0, %v426
  %v428 = vrot.slane %v108, %v427
  %v429 = vlaneseq
  %v430 = vshrl.u32 %v429, 7
  %v431 = vsub.s32 0, %v430
  %v432 = vrot.slane %v112, %v431
  %v433 = vlaneseq
  %v434 = vshrl.u32 %v433, 7
  %v435 = vsub.s32 0, %v434
  %v436 = vrot.slane %v116, %v435
  %v437 = vlaneseq
  %v438 = vshrl.u32 %v437, 7
  %v439 = vsub.s32 0, %v438
  %v440 = vrot.slane %v120, %v439
  %v441 = vlaneseq
  %v442 = vshrl.u32 %v441, 7
  %v443 = vsub.s32 0, %v442
  %v444 = vrot.slane %v124, %v443
  %v445 = vlaneseq
  %v446 = vshrl.u32 %v445, 7
  %v447 = vsub.s32 0, %v446
  %v448 = vrot.slane %v128, %v447
  %v449 = vlaneseq
  %v450 = vshrl.u32 %v449, 7
  %v451 = vsub.s32 0, %v450
  %v452 = vrot.slane %v132, %v451
  %v453 = vlaneseq
  %v454 = vshrl.u32 %v453, 7
  %v455 = vsub.s32 0, %v454
  %v456 = vrot.slane %v136, %v455
  %v457 = vlaneseq
  %v458 = vshrl.u32 %v457, 7
  %v459 = vsub.s32 0, %v458
  %v460 = vrot.slane %v140, %v459
  %v461 = vlaneseq
  %v462 = vshrl.u32 %v461, 7
  %v463 = vsub.s32 0, %v462
  %v464 = vrot.slane %v144, %v463
  %v465 = vlaneseq
  %v466 = vshrl.u32 %v465, 7
  %v467 = vsub.s32 0, %v466
  %v468 = vrot.slane %v148, %v467
  %v469 = vlaneseq
  %v470 = vshrl.u32 %v469, 7
  %v471 = vsub.s32 0, %v470
  %v472 = vrot.slane %v152, %v471
  %v473 = vlaneseq
  %v474 = vshrl.u32 %v473, 7
  %v475 = vsub.s32 0, %v474
  %v476 = vrot.slane %v156, %v475
  %v477 = vlaneseq
  %v478 = vshrl.u32 %v477, 7
  %v479 = vsub.s32 0, %v478
  %v480 = vrot.slane %v160, %v479
  %v481 = vlaneseq
  %v482 = vshrl.u32 %v481, 7
  %v483 = vsub.s32 0, %v482
  %v484 = vrot.slane %v164, %v483
  %v485 = vlaneseq
  %v486 = vshrl.u32 %v485, 7
  %v487 = vsub.s32 0, %v486
  %v488 = vrot.slane %v168, %v487
  %v489 = vlaneseq
  %v490 = vshrl.u32 %v489, 7
  %v491 = vsub.s32 0, %v490
  %v492 = vrot.slane %v172, %v491
  %v493 = vlaneseq
  %v494 = vshrl.u32 %v493, 7
  %v495 = vsub.s32 0, %v494
  %v496 = vrot.slane %v176, %v495
  %v497 = vlaneseq
  %v498 = vshrl.u32 %v497, 7
  %v499 = vsub.s32 0, %v498
  %v500 = vrot.slane %v180, %v499
  %v501 = vlaneseq
  %v502 = vshrl.u32 %v501, 7
  %v503 = vsub.s32 0, %v502
  %v504 = vrot.slane %v184, %v503
  %v505 = vlaneseq
  %v506 = vshrl.u32 %v505, 7
  %v507 = vsub.s32 0, %v506
  %v508 = vrot.slane %v188, %v507
  %v509 = vlaneseq
  %v510 = vshrl.u32 %v509, 7
  %v511 = vsub.s32 0, %v510
  %v512 = vrot.slane %v192, %v511
  %v513 = vlaneseq
  %v514 = vshrl.u32 %v513, 7
  %v515 = vsub.s32 0, %v514
  %v516 = vrot.slane %v196, %v515
  %v517 = vlaneseq
  %v518 = vshrl.u32 %v517, 7
  %v519 = vsub.s32 0, %v518
  %v520 = vrot.slane %v200, %v519
  %v521 = vlaneseq
  %v522 = vshrl.u32 %v521, 7
  %v523 = vsub.s32 0, %v522
  %v524 = vrot.slane %v204, %v523
  %v525 = vlaneseq
  %v526 = vshrl.u32 %v525, 7
  %v527 = vsub.s32 0, %v526
  %v528 = vrot.slane %v208, %v527
  %v529 = vlaneseq
  %v530 = vshrl.u32 %v529, 7
  %v531 = vsub.s32 0, %v530
  %v532 = vrot.slane %v212, %v531
  %v533 = vlaneseq
  %v534 = vshrl.u32 %v533, 7
  %v535 = vsub.s32 0, %v534
  %v536 = vrot.slane %v216, %v535
  %v537 = vlaneseq
  %v538 = vshrl.u32 %v537, 7
  %v539 = vsub.s32 0, %v538
  %v540 = vrot.slane %v220, %v539
  %v541 = vlaneseq
  %v542 = vshrl.u32 %v541, 7
  %v543 = vsub.s32 0, %v542
  %v544 = vrot.slane %v224, %v543
  %v545 = vlaneseq
  %v546 = vshrl.u32 %v545, 7
  %v547 = vsub.s32 0, %v546
  %v548 = vrot.slane %v228, %v547
  %v549 = vlaneseq
  %v550 = vshrl.u32 %v549, 7
  %v551 = vsub.s32 0, %v550
  %v552 = vrot.slane %v232, %v551
  %v553 = vlaneseq
  %v554 = vshrl.u32 %v553, 7
  %v555 = vsub.s32 0, %v554
  %v556 = vrot.slane %v236, %v555
  %v557 = vlaneseq
  %v558 = vshrl.u32 %v557, 7
  %v559 = vsub.s32 0, %v558
  %v560 = vrot.slane %v240, %v559
  %v561 = vlaneseq
  %v562 = vshrl.u32 %v561, 7
  %v563 = vsub.s32 0, %v562
  %v564 = vrot.slane %v244, %v563
  %v565 = vlaneseq
  %v566 = vshrl.u32 %v565, 7
  %v567 = vsub.s32 0, %v566
  %v568 = vrot.slane %v248, %v567
  %v569 = vlaneseq
  %v570 = vshrl.u32 %v569, 7
  %v571 = vsub.s32 0, %v570
  %v572 = vrot.slane %v252, %v571
  %v573 = vlaneseq
  %v574 = vshrl.u32 %v573, 7
  %v575 = vsub.s32 0, %v574
  %v576 = vrot.slane %v256, %v575
  %v577 = vlaneseq
  %v578 = vshrl.u32 %v577, 7
  %v579 = vsub.s32 0, %v578
  %v580 = vrot.slane %v260, %v579
  %v581 = vlaneseq
  %v582 = vshrl.u32 %v581, 7
  %v583 = vsub.s32 0, %v582
  %v584 = vrot.slane %v264, %v583
  %v585 = vlaneseq
  %v586 = vshrl.u32 %v585, 7
  %v587 = vsub.s32 0, %v586
  %v588 = vrot.slane %v268, %v587
  %v589 = vlaneseq
  %v590 = vshrl.u32 %v589, 7
  %v591 = vsub.s32 0, %v590
  %v592 = vrot.slane %v272, %v591
  %v593 = vlaneseq
  %v594 = vshrl.u32 %v593, 7
  %v595 = vsub.s32 0, %v594
  %v596 = vrot.slane %v276, %v595
  %v597 = vlaneseq
  %v598 = vshrl.u32 %v597, 7
  %v599 = vsub.s32 0, %v598
  %v600 = vrot.slane %v280, %v599
  %v601 = vlaneseq
  %v602 = vshrl.u32 %v601, 7
  %v603 = vsub.s32 0, %v602
  %v604 = vrot.slane %v284, %v603
  %v605 = vlaneseq
  %v606 = vshrl.u32 %v605, 7
  %v607 = vsub.s32 0, %v606
  %v608 = vrot.slane %v288, %v607
  %v609 = vlaneseq
  %v610 = vshrl.u32 %v609, 7
  %v611 = vsub.s32 0, %v610
  %v612 = vrot.slane %v292, %v611
  %v613 = vlaneseq
  %v614 = vshrl.u32 %v613, 7
  %v615 = vsub.s32 0, %v614
  %v616 = vrot.slane %v296, %v615
  %v617 = vlaneseq
  %v618 = vshrl.u32 %v617, 7
  %v619 = vsub.s32 0, %v618
  %v620 = vrot.slane %v300, %v619
  %v621 = vlaneseq
  %v622 = vshrl.u32 %v621, 7
  %v623 = vsub.s32 0, %v622
  %v624 = vrot.slane %v304, %v623
  %v625 = vlaneseq
  %v626 = vshrl.u32 %v625, 7
  %v627 = vsub.s32 0, %v626
  %v628 = vrot.slane %v308, %v627
  %v629 = vlaneseq
  %v630 = vshrl.u32 %v629, 7
  %v631 = vsub.s32 0, %v630
  %v632 = vrot.slane %v312, %v631
  %v633 = vlaneseq
  %v634 = vshrl.u32 %v633, 7
  %v635 = vsub.s32 0, %v634
  %v636 = vrot.slane %v316, %v635
  %v637 = vlaneseq
  %v638 = vshrl.u32 %v637, 7
  %v639 = vsub.s32 0, %v638
  %v640 = vrot.slane %v320, %v639
  %v641 = vlaneseq
  %v642 = vshrl.u32 %v641, 7
  %v643 = vsub.s32 0, %v642
  %v644 = vrot.slane %v324, %v643
  %v645 = vlaneseq
  %v646 = vshrl.u32 %v645, 7
  %v647 = vsub.s32 0, %v646
  %v648 = vrot.slane %v328, %v647
  %v649 = vlaneseq
  %v650 = vshrl.u32 %v649, 7
  %v651 = vsub.s32 0, %v650
  %v652 = vrot.slane %v332, %v651
  %v653 = vlaneseq
  %v654 = vshrl.u32 %v653, 7
  %v655 = vsub.s32 0, %v654
  %v656 = vrot.slane %v336, %v655
  %v657 = vlaneseq
  %v658 = vshrl.u32 %v657, 7
  %v659 = vsub.s32 0, %v658
  %v660 = vrot.slane %v340, %v659
  %v661 = vmul.f32 %v51, %v408
  %v662 = vmul.f32 %v51, %v412
  %v663 = vmul.f32 %v51, %v416
  %v664 = vmul.f32 %v51, %v420
  %v665 = vmul.f32 %v51, %v424
  %v666 = vmul.f32 %v51, %v428
  %v667 = vmul.f32 %v51, %v432
  %v668 = vmul.f32 %v51, %v436
  %v669 = vmul.f32 %v51, %v440
  %v670 = vmul.f32 %v51, %v444
  %v671 = vmul.f32 %v51, %v448
  %v672 = vmul.f32 %v51, %v452
  %v673 = vmul.f32 %v51, %v456
  %v674 = vmul.f32 %v51, %v460
  %v675 = vmul.f32 %v51, %v464
  %v676 = vmul.f32 %v51, %v468
  %v677 = vmul.f32 %v51, %v472
  %v678 = vmul.f32 %v51, %v476
  %v679 = vmul.f32 %v51, %v480
  %v680 = vmul.f32 %v51, %v484
  %v681 = vmul.f32 %v51, %v488
  %v682 = vmul.f32 %v51, %v492
  %v683 = vmul.f32 %v51, %v496
  %v684 = vmul.f32 %v51, %v500
  %v685 = vmul.f32 %v51, %v504
  %v686 = vmul.f32 %v51, %v508
  %v687 = vmul.f32 %v51, %v512
  %v688 = vmul.f32 %v51, %v516
  %v689 = vmul.f32 %v51, %v520
  %v690 = vmul.f32 %v51, %v524
  %v691 = vmul.f32 %v51, %v528
  %v692 = vmul.f32 %v51, %v532
  %v693 = vmul.f32 %v51, %v536
  %v694 = vmul.f32 %v51, %v540
  %v695 = vmul.f32 %v51, %v544
  %v696 = vmul.f32 %v51, %v548
  %v697 = vmul.f32 %v51, %v552
  %v698 = vmul.f32 %v51, %v556
  %v699 = vmul.f32 %v51, %v560
  %v700 = vmul.f32 %v51, %v564
  %v701 = vmul.f32 %v51, %v568
  %v702 = vmul.f32 %v51, %v572
  %v703 = vmul.f32 %v51, %v576
  %v704 = vmul.f32 %v51, %v580
  %v705 = vmul.f32 %v51, %v584
  %v706 = vmul.f32 %v51, %v588
  %v707 = vmul.f32 %v51, %v592
  %v708 = vmul.f32 %v51, %v596
  %v709 = vmul.f32 %v51, %v600
  %v710 = vmul.f32 %v51, %v604
  %v711 = vmul.f32 %v51, %v608
  %v712 = vmul.f32 %v51, %v612
  %v713 = vmul.f32 %v51, %v616
  %v714 = vmul.f32 %v51, %v620
  %v715 = vmul.f32 %v51, %v624
  %v716 = vmul.f32 %v51, %v628
  %v717 = vmul.f32 %v51, %v632
  %v718 = vmul.f32 %v51, %v636
  %v719 = vmul.f32 %v51, %v640
  %v720 = vmul.f32 %v51, %v644
  %v721 = vmul.f32 %v51, %v648
  %v722 = vmul.f32 %v51, %v652
  %v723 = vmul.f32 %v51, %v656
  %v724 = vmul.f32 %v51, %v660
  %726 = vset.pattern.permute.xlu0 0
  %727 = vperm.xlu0 %726, %v47
  %v728 = vpop.permute.xlu0 %727
  %v730 = vadd.f32 %v728, %v661
  %v731 = vadd.f32 %v728, %v662
  %v732 = vadd.f32 %v728, %v663
  %v733 = vadd.f32 %v728, %v664
  %v734 = vadd.f32 %v728, %v665
  %v735 = vadd.f32 %v728, %v666
  %v736 = vadd.f32 %v728, %v667
  %v737 = vadd.f32 %v728, %v668
  %v738 = vadd.f32 %v728, %v669
  %v739 = vadd.f32 %v728, %v670
  %v740 = vadd.f32 %v728, %v671
  %v741 = vadd.f32 %v728, %v672
  %v742 = vadd.f32 %v728, %v673
  %v743 = vadd.f32 %v728, %v674
  %v744 = vadd.f32 %v728, %v675
  %v745 = vadd.f32 %v728, %v676
  %v746 = vadd.f32 %v728, %v677
  %v747 = vadd.f32 %v728, %v678
  %v748 = vadd.f32 %v728, %v679
  %v749 = vadd.f32 %v728, %v680
  %v750 = vadd.f32 %v728, %v681
  %v751 = vadd.f32 %v728, %v682
  %v752 = vadd.f32 %v728, %v683
  %v753 = vadd.f32 %v728, %v684
  %v754 = vadd.f32 %v728, %v685
  %v755 = vadd.f32 %v728, %v686
  %v756 = vadd.f32 %v728, %v687
  %v757 = vadd.f32 %v728, %v688
  %v758 = vadd.f32 %v728, %v689
  %v759 = vadd.f32 %v728, %v690
  %v760 = vadd.f32 %v728, %v691
  %v761 = vadd.f32 %v728, %v692
  %v762 = vadd.f32 %v728, %v693
  %v763 = vadd.f32 %v728, %v694
  %v764 = vadd.f32 %v728, %v695
  %v765 = vadd.f32 %v728, %v696
  %v766 = vadd.f32 %v728, %v697
  %v767 = vadd.f32 %v728, %v698
  %v768 = vadd.f32 %v728, %v699
  %v769 = vadd.f32 %v728, %v700
  %v770 = vadd.f32 %v728, %v701
  %v771 = vadd.f32 %v728, %v702
  %v772 = vadd.f32 %v728, %v703
  %v773 = vadd.f32 %v728, %v704
  %v774 = vadd.f32 %v728, %v705
  %v775 = vadd.f32 %v728, %v706
  %v776 = vadd.f32 %v728, %v707
  %v777 = vadd.f32 %v728, %v708
  %v778 = vadd.f32 %v728, %v709
  %v779 = vadd.f32 %v728, %v710
  %v780 = vadd.f32 %v728, %v711
  %v781 = vadd.f32 %v728, %v712
  %v782 = vadd.f32 %v728, %v713
  %v783 = vadd.f32 %v728, %v714
  %v784 = vadd.f32 %v728, %v715
  %v785 = vadd.f32 %v728, %v716
  %v786 = vadd.f32 %v728, %v717
  %v787 = vadd.f32 %v728, %v718
  %v788 = vadd.f32 %v728, %v719
  %v789 = vadd.f32 %v728, %v720
  %v790 = vadd.f32 %v728, %v721
  %v791 = vadd.f32 %v728, %v722
  %v792 = vadd.f32 %v728, %v723
  %v793 = vadd.f32 %v728, %v724
  %794 = vset.pattern.permute.xlu0 1
  %795 = vperm.xlu0 %794, %v14
  %v796 = vpop.permute.xlu0 %795
  %v798 = vlaneseq
  %v799 = vshrl.u32 %v798, 7
  %v800 = vsub.s32 1, %v799
  %v801 = vrot.slane %v15, %v800
  %v802 = vlaneseq
  %v803 = vshrl.u32 %v802, 7
  %v804 = vsub.s32 5, %v803
  %v805 = vrot.slane %v15, %v804
  %v806 = vlaneseq
  %v807 = vshrl.u32 %v806, 7
  %v808 = vsub.s32 1, %v807
  %v809 = vrot.slane %v16, %v808
  %v810 = vlaneseq
  %v811 = vshrl.u32 %v810, 7
  %v812 = vsub.s32 5, %v811
  %v813 = vrot.slane %v16, %v812
  %v814 = vlaneseq
  %v815 = vshrl.u32 %v814, 7
  %v816 = vsub.s32 1, %v815
  %v817 = vrot.slane %v17, %v816
  %v818 = vlaneseq
  %v819 = vshrl.u32 %v818, 7
  %v820 = vsub.s32 5, %v819
  %v821 = vrot.slane %v17, %v820
  %v822 = vlaneseq
  %v823 = vshrl.u32 %v822, 7
  %v824 = vsub.s32 1, %v823
  %v825 = vrot.slane %v18, %v824
  %v826 = vlaneseq
  %v827 = vshrl.u32 %v826, 7
  %v828 = vsub.s32 5, %v827
  %v829 = vrot.slane %v18, %v828
  %v830 = vlaneseq
  %v831 = vshrl.u32 %v830, 7
  %v832 = vsub.s32 1, %v831
  %v833 = vrot.slane %v19, %v832
  %v834 = vlaneseq
  %v835 = vshrl.u32 %v834, 7
  %v836 = vsub.s32 5, %v835
  %v837 = vrot.slane %v19, %v836
  %v838 = vlaneseq
  %v839 = vshrl.u32 %v838, 7
  %v840 = vsub.s32 1, %v839
  %v841 = vrot.slane %v20, %v840
  %v842 = vlaneseq
  %v843 = vshrl.u32 %v842, 7
  %v844 = vsub.s32 5, %v843
  %v845 = vrot.slane %v20, %v844
  %v846 = vlaneseq
  %v847 = vshrl.u32 %v846, 7
  %v848 = vsub.s32 1, %v847
  %v849 = vrot.slane %v21, %v848
  %v850 = vlaneseq
  %v851 = vshrl.u32 %v850, 7
  %v852 = vsub.s32 5, %v851
  %v853 = vrot.slane %v21, %v852
  %v854 = vlaneseq
  %v855 = vshrl.u32 %v854, 7
  %v856 = vsub.s32 1, %v855
  %v857 = vrot.slane %v22, %v856
  %v858 = vlaneseq
  %v859 = vshrl.u32 %v858, 7
  %v860 = vsub.s32 5, %v859
  %v861 = vrot.slane %v22, %v860
  %v862 = vlaneseq
  %v863 = vshrl.u32 %v862, 7
  %v864 = vsub.s32 1, %v863
  %v865 = vrot.slane %v23, %v864
  %v866 = vlaneseq
  %v867 = vshrl.u32 %v866, 7
  %v868 = vsub.s32 5, %v867
  %v869 = vrot.slane %v23, %v868
  %v870 = vlaneseq
  %v871 = vshrl.u32 %v870, 7
  %v872 = vsub.s32 1, %v871
  %v873 = vrot.slane %v24, %v872
  %v874 = vlaneseq
  %v875 = vshrl.u32 %v874, 7
  %v876 = vsub.s32 5, %v875
  %v877 = vrot.slane %v24, %v876
  %v878 = vlaneseq
  %v879 = vshrl.u32 %v878, 7
  %v880 = vsub.s32 1, %v879
  %v881 = vrot.slane %v25, %v880
  %v882 = vlaneseq
  %v883 = vshrl.u32 %v882, 7
  %v884 = vsub.s32 5, %v883
  %v885 = vrot.slane %v25, %v884
  %v886 = vlaneseq
  %v887 = vshrl.u32 %v886, 7
  %v888 = vsub.s32 1, %v887
  %v889 = vrot.slane %v26, %v888
  %v890 = vlaneseq
  %v891 = vshrl.u32 %v890, 7
  %v892 = vsub.s32 5, %v891
  %v893 = vrot.slane %v26, %v892
  %v894 = vlaneseq
  %v895 = vshrl.u32 %v894, 7
  %v896 = vsub.s32 1, %v895
  %v897 = vrot.slane %v27, %v896
  %v898 = vlaneseq
  %v899 = vshrl.u32 %v898, 7
  %v900 = vsub.s32 5, %v899
  %v901 = vrot.slane %v27, %v900
  %v902 = vlaneseq
  %v903 = vshrl.u32 %v902, 7
  %v904 = vsub.s32 1, %v903
  %v905 = vrot.slane %v28, %v904
  %v906 = vlaneseq
  %v907 = vshrl.u32 %v906, 7
  %v908 = vsub.s32 5, %v907
  %v909 = vrot.slane %v28, %v908
  %v910 = vlaneseq
  %v911 = vshrl.u32 %v910, 7
  %v912 = vsub.s32 1, %v911
  %v913 = vrot.slane %v29, %v912
  %v914 = vlaneseq
  %v915 = vshrl.u32 %v914, 7
  %v916 = vsub.s32 5, %v915
  %v917 = vrot.slane %v29, %v916
  %v918 = vlaneseq
  %v919 = vshrl.u32 %v918, 7
  %v920 = vsub.s32 1, %v919
  %v921 = vrot.slane %v30, %v920
  %v922 = vlaneseq
  %v923 = vshrl.u32 %v922, 7
  %v924 = vsub.s32 5, %v923
  %v925 = vrot.slane %v30, %v924
  %v926 = vlaneseq
  %v927 = vshrl.u32 %v926, 7
  %v928 = vsub.s32 1, %v927
  %v929 = vrot.slane %v31, %v928
  %v930 = vlaneseq
  %v931 = vshrl.u32 %v930, 7
  %v932 = vsub.s32 5, %v931
  %v933 = vrot.slane %v31, %v932
  %v934 = vlaneseq
  %v935 = vshrl.u32 %v934, 7
  %v936 = vsub.s32 1, %v935
  %v937 = vrot.slane %v32, %v936
  %v938 = vlaneseq
  %v939 = vshrl.u32 %v938, 7
  %v940 = vsub.s32 5, %v939
  %v941 = vrot.slane %v32, %v940
  %v942 = vlaneseq
  %v943 = vshrl.u32 %v942, 7
  %v944 = vsub.s32 1, %v943
  %v945 = vrot.slane %v33, %v944
  %v946 = vlaneseq
  %v947 = vshrl.u32 %v946, 7
  %v948 = vsub.s32 5, %v947
  %v949 = vrot.slane %v33, %v948
  %v950 = vlaneseq
  %v951 = vshrl.u32 %v950, 7
  %v952 = vsub.s32 1, %v951
  %v953 = vrot.slane %v34, %v952
  %v954 = vlaneseq
  %v955 = vshrl.u32 %v954, 7
  %v956 = vsub.s32 5, %v955
  %v957 = vrot.slane %v34, %v956
  %v958 = vlaneseq
  %v959 = vshrl.u32 %v958, 7
  %v960 = vsub.s32 1, %v959
  %v961 = vrot.slane %v35, %v960
  %v962 = vlaneseq
  %v963 = vshrl.u32 %v962, 7
  %v964 = vsub.s32 5, %v963
  %v965 = vrot.slane %v35, %v964
  %v966 = vlaneseq
  %v967 = vshrl.u32 %v966, 7
  %v968 = vsub.s32 1, %v967
  %v969 = vrot.slane %v36, %v968
  %v970 = vlaneseq
  %v971 = vshrl.u32 %v970, 7
  %v972 = vsub.s32 5, %v971
  %v973 = vrot.slane %v36, %v972
  %v974 = vlaneseq
  %v975 = vshrl.u32 %v974, 7
  %v976 = vsub.s32 1, %v975
  %v977 = vrot.slane %v37, %v976
  %v978 = vlaneseq
  %v979 = vshrl.u32 %v978, 7
  %v980 = vsub.s32 5, %v979
  %v981 = vrot.slane %v37, %v980
  %v982 = vlaneseq
  %v983 = vshrl.u32 %v982, 7
  %v984 = vsub.s32 1, %v983
  %v985 = vrot.slane %v38, %v984
  %v986 = vlaneseq
  %v987 = vshrl.u32 %v986, 7
  %v988 = vsub.s32 5, %v987
  %v989 = vrot.slane %v38, %v988
  %v990 = vlaneseq
  %v991 = vshrl.u32 %v990, 7
  %v992 = vsub.s32 1, %v991
  %v993 = vrot.slane %v39, %v992
  %v994 = vlaneseq
  %v995 = vshrl.u32 %v994, 7
  %v996 = vsub.s32 5, %v995
  %v997 = vrot.slane %v39, %v996
  %v998 = vlaneseq
  %v999 = vshrl.u32 %v998, 7
  %v1000 = vsub.s32 1, %v999
  %v1001 = vrot.slane %v40, %v1000
  %v1002 = vlaneseq
  %v1003 = vshrl.u32 %v1002, 7
  %v1004 = vsub.s32 5, %v1003
  %v1005 = vrot.slane %v40, %v1004
  %v1006 = vlaneseq
  %v1007 = vshrl.u32 %v1006, 7
  %v1008 = vsub.s32 1, %v1007
  %v1009 = vrot.slane %v41, %v1008
  %v1010 = vlaneseq
  %v1011 = vshrl.u32 %v1010, 7
  %v1012 = vsub.s32 5, %v1011
  %v1013 = vrot.slane %v41, %v1012
  %v1014 = vlaneseq
  %v1015 = vshrl.u32 %v1014, 7
  %v1016 = vsub.s32 1, %v1015
  %v1017 = vrot.slane %v42, %v1016
  %v1018 = vlaneseq
  %v1019 = vshrl.u32 %v1018, 7
  %v1020 = vsub.s32 5, %v1019
  %v1021 = vrot.slane %v42, %v1020
  %v1022 = vlaneseq
  %v1023 = vshrl.u32 %v1022, 7
  %v1024 = vsub.s32 1, %v1023
  %v1025 = vrot.slane %v43, %v1024
  %v1026 = vlaneseq
  %v1027 = vshrl.u32 %v1026, 7
  %v1028 = vsub.s32 5, %v1027
  %v1029 = vrot.slane %v43, %v1028
  %v1030 = vlaneseq
  %v1031 = vshrl.u32 %v1030, 7
  %v1032 = vsub.s32 1, %v1031
  %v1033 = vrot.slane %v44, %v1032
  %v1034 = vlaneseq
  %v1035 = vshrl.u32 %v1034, 7
  %v1036 = vsub.s32 5, %v1035
  %v1037 = vrot.slane %v44, %v1036
  %v1038 = vlaneseq
  %v1039 = vshrl.u32 %v1038, 7
  %v1040 = vsub.s32 1, %v1039
  %v1041 = vrot.slane %v45, %v1040
  %v1042 = vlaneseq
  %v1043 = vshrl.u32 %v1042, 7
  %v1044 = vsub.s32 5, %v1043
  %v1045 = vrot.slane %v45, %v1044
  %v1046 = vlaneseq
  %v1047 = vshrl.u32 %v1046, 7
  %v1048 = vsub.s32 1, %v1047
  %v1049 = vrot.slane %v46, %v1048
  %v1050 = vlaneseq
  %v1051 = vshrl.u32 %v1050, 7
  %v1052 = vsub.s32 5, %v1051
  %v1053 = vrot.slane %v46, %v1052
  %v1118 = vlaneseq
  %v1119 = vshrl.u32 %v1118, 7
  %v1120 = vsub.s32 1, %v1119
  %v1121 = vrot.slane %v801, %v1120
  %v1122 = vlaneseq
  %v1123 = vshrl.u32 %v1122, 7
  %v1124 = vsub.s32 1, %v1123
  %v1125 = vrot.slane %v805, %v1124
  %v1126 = vlaneseq
  %v1127 = vshrl.u32 %v1126, 7
  %v1128 = vsub.s32 1, %v1127
  %v1129 = vrot.slane %v809, %v1128
  %v1130 = vlaneseq
  %v1131 = vshrl.u32 %v1130, 7
  %v1132 = vsub.s32 1, %v1131
  %v1133 = vrot.slane %v813, %v1132
  %v1134 = vlaneseq
  %v1135 = vshrl.u32 %v1134, 7
  %v1136 = vsub.s32 1, %v1135
  %v1137 = vrot.slane %v817, %v1136
  %v1138 = vlaneseq
  %v1139 = vshrl.u32 %v1138, 7
  %v1140 = vsub.s32 1, %v1139
  %v1141 = vrot.slane %v821, %v1140
  %v1142 = vlaneseq
  %v1143 = vshrl.u32 %v1142, 7
  %v1144 = vsub.s32 1, %v1143
  %v1145 = vrot.slane %v825, %v1144
  %v1146 = vlaneseq
  %v1147 = vshrl.u32 %v1146, 7
  %v1148 = vsub.s32 1, %v1147
  %v1149 = vrot.slane %v829, %v1148
  %v1150 = vlaneseq
  %v1151 = vshrl.u32 %v1150, 7
  %v1152 = vsub.s32 1, %v1151
  %v1153 = vrot.slane %v833, %v1152
  %v1154 = vlaneseq
  %v1155 = vshrl.u32 %v1154, 7
  %v1156 = vsub.s32 1, %v1155
  %v1157 = vrot.slane %v837, %v1156
  %v1158 = vlaneseq
  %v1159 = vshrl.u32 %v1158, 7
  %v1160 = vsub.s32 1, %v1159
  %v1161 = vrot.slane %v841, %v1160
  %v1162 = vlaneseq
  %v1163 = vshrl.u32 %v1162, 7
  %v1164 = vsub.s32 1, %v1163
  %v1165 = vrot.slane %v845, %v1164
  %v1166 = vlaneseq
  %v1167 = vshrl.u32 %v1166, 7
  %v1168 = vsub.s32 1, %v1167
  %v1169 = vrot.slane %v849, %v1168
  %v1170 = vlaneseq
  %v1171 = vshrl.u32 %v1170, 7
  %v1172 = vsub.s32 1, %v1171
  %v1173 = vrot.slane %v853, %v1172
  %v1174 = vlaneseq
  %v1175 = vshrl.u32 %v1174, 7
  %v1176 = vsub.s32 1, %v1175
  %v1177 = vrot.slane %v857, %v1176
  %v1178 = vlaneseq
  %v1179 = vshrl.u32 %v1178, 7
  %v1180 = vsub.s32 1, %v1179
  %v1181 = vrot.slane %v861, %v1180
  %v1182 = vlaneseq
  %v1183 = vshrl.u32 %v1182, 7
  %v1184 = vsub.s32 1, %v1183
  %v1185 = vrot.slane %v865, %v1184
  %v1186 = vlaneseq
  %v1187 = vshrl.u32 %v1186, 7
  %v1188 = vsub.s32 1, %v1187
  %v1189 = vrot.slane %v869, %v1188
  %v1190 = vlaneseq
  %v1191 = vshrl.u32 %v1190, 7
  %v1192 = vsub.s32 1, %v1191
  %v1193 = vrot.slane %v873, %v1192
  %v1194 = vlaneseq
  %v1195 = vshrl.u32 %v1194, 7
  %v1196 = vsub.s32 1, %v1195
  %v1197 = vrot.slane %v877, %v1196
  %v1198 = vlaneseq
  %v1199 = vshrl.u32 %v1198, 7
  %v1200 = vsub.s32 1, %v1199
  %v1201 = vrot.slane %v881, %v1200
  %v1202 = vlaneseq
  %v1203 = vshrl.u32 %v1202, 7
  %v1204 = vsub.s32 1, %v1203
  %v1205 = vrot.slane %v885, %v1204
  %v1206 = vlaneseq
  %v1207 = vshrl.u32 %v1206, 7
  %v1208 = vsub.s32 1, %v1207
  %v1209 = vrot.slane %v889, %v1208
  %v1210 = vlaneseq
  %v1211 = vshrl.u32 %v1210, 7
  %v1212 = vsub.s32 1, %v1211
  %v1213 = vrot.slane %v893, %v1212
  %v1214 = vlaneseq
  %v1215 = vshrl.u32 %v1214, 7
  %v1216 = vsub.s32 1, %v1215
  %v1217 = vrot.slane %v897, %v1216
  %v1218 = vlaneseq
  %v1219 = vshrl.u32 %v1218, 7
  %v1220 = vsub.s32 1, %v1219
  %v1221 = vrot.slane %v901, %v1220
  %v1222 = vlaneseq
  %v1223 = vshrl.u32 %v1222, 7
  %v1224 = vsub.s32 1, %v1223
  %v1225 = vrot.slane %v905, %v1224
  %v1226 = vlaneseq
  %v1227 = vshrl.u32 %v1226, 7
  %v1228 = vsub.s32 1, %v1227
  %v1229 = vrot.slane %v909, %v1228
  %v1230 = vlaneseq
  %v1231 = vshrl.u32 %v1230, 7
  %v1232 = vsub.s32 1, %v1231
  %v1233 = vrot.slane %v913, %v1232
  %v1234 = vlaneseq
  %v1235 = vshrl.u32 %v1234, 7
  %v1236 = vsub.s32 1, %v1235
  %v1237 = vrot.slane %v917, %v1236
  %v1238 = vlaneseq
  %v1239 = vshrl.u32 %v1238, 7
  %v1240 = vsub.s32 1, %v1239
  %v1241 = vrot.slane %v921, %v1240
  %v1242 = vlaneseq
  %v1243 = vshrl.u32 %v1242, 7
  %v1244 = vsub.s32 1, %v1243
  %v1245 = vrot.slane %v925, %v1244
  %v1246 = vlaneseq
  %v1247 = vshrl.u32 %v1246, 7
  %v1248 = vsub.s32 1, %v1247
  %v1249 = vrot.slane %v929, %v1248
  %v1250 = vlaneseq
  %v1251 = vshrl.u32 %v1250, 7
  %v1252 = vsub.s32 1, %v1251
  %v1253 = vrot.slane %v933, %v1252
  %v1254 = vlaneseq
  %v1255 = vshrl.u32 %v1254, 7
  %v1256 = vsub.s32 1, %v1255
  %v1257 = vrot.slane %v937, %v1256
  %v1258 = vlaneseq
  %v1259 = vshrl.u32 %v1258, 7
  %v1260 = vsub.s32 1, %v1259
  %v1261 = vrot.slane %v941, %v1260
  %v1262 = vlaneseq
  %v1263 = vshrl.u32 %v1262, 7
  %v1264 = vsub.s32 1, %v1263
  %v1265 = vrot.slane %v945, %v1264
  %v1266 = vlaneseq
  %v1267 = vshrl.u32 %v1266, 7
  %v1268 = vsub.s32 1, %v1267
  %v1269 = vrot.slane %v949, %v1268
  %v1270 = vlaneseq
  %v1271 = vshrl.u32 %v1270, 7
  %v1272 = vsub.s32 1, %v1271
  %v1273 = vrot.slane %v953, %v1272
  %v1274 = vlaneseq
  %v1275 = vshrl.u32 %v1274, 7
  %v1276 = vsub.s32 1, %v1275
  %v1277 = vrot.slane %v957, %v1276
  %v1278 = vlaneseq
  %v1279 = vshrl.u32 %v1278, 7
  %v1280 = vsub.s32 1, %v1279
  %v1281 = vrot.slane %v961, %v1280
  %v1282 = vlaneseq
  %v1283 = vshrl.u32 %v1282, 7
  %v1284 = vsub.s32 1, %v1283
  %v1285 = vrot.slane %v965, %v1284
  %v1286 = vlaneseq
  %v1287 = vshrl.u32 %v1286, 7
  %v1288 = vsub.s32 1, %v1287
  %v1289 = vrot.slane %v969, %v1288
  %v1290 = vlaneseq
  %v1291 = vshrl.u32 %v1290, 7
  %v1292 = vsub.s32 1, %v1291
  %v1293 = vrot.slane %v973, %v1292
  %v1294 = vlaneseq
  %v1295 = vshrl.u32 %v1294, 7
  %v1296 = vsub.s32 1, %v1295
  %v1297 = vrot.slane %v977, %v1296
  %v1298 = vlaneseq
  %v1299 = vshrl.u32 %v1298, 7
  %v1300 = vsub.s32 1, %v1299
  %v1301 = vrot.slane %v981, %v1300
  %v1302 = vlaneseq
  %v1303 = vshrl.u32 %v1302, 7
  %v1304 = vsub.s32 1, %v1303
  %v1305 = vrot.slane %v985, %v1304
  %v1306 = vlaneseq
  %v1307 = vshrl.u32 %v1306, 7
  %v1308 = vsub.s32 1, %v1307
  %v1309 = vrot.slane %v989, %v1308
  %v1310 = vlaneseq
  %v1311 = vshrl.u32 %v1310, 7
  %v1312 = vsub.s32 1, %v1311
  %v1313 = vrot.slane %v993, %v1312
  %v1314 = vlaneseq
  %v1315 = vshrl.u32 %v1314, 7
  %v1316 = vsub.s32 1, %v1315
  %v1317 = vrot.slane %v997, %v1316
  %v1318 = vlaneseq
  %v1319 = vshrl.u32 %v1318, 7
  %v1320 = vsub.s32 1, %v1319
  %v1321 = vrot.slane %v1001, %v1320
  %v1322 = vlaneseq
  %v1323 = vshrl.u32 %v1322, 7
  %v1324 = vsub.s32 1, %v1323
  %v1325 = vrot.slane %v1005, %v1324
  %v1326 = vlaneseq
  %v1327 = vshrl.u32 %v1326, 7
  %v1328 = vsub.s32 1, %v1327
  %v1329 = vrot.slane %v1009, %v1328
  %v1330 = vlaneseq
  %v1331 = vshrl.u32 %v1330, 7
  %v1332 = vsub.s32 1, %v1331
  %v1333 = vrot.slane %v1013, %v1332
  %v1334 = vlaneseq
  %v1335 = vshrl.u32 %v1334, 7
  %v1336 = vsub.s32 1, %v1335
  %v1337 = vrot.slane %v1017, %v1336
  %v1338 = vlaneseq
  %v1339 = vshrl.u32 %v1338, 7
  %v1340 = vsub.s32 1, %v1339
  %v1341 = vrot.slane %v1021, %v1340
  %v1342 = vlaneseq
  %v1343 = vshrl.u32 %v1342, 7
  %v1344 = vsub.s32 1, %v1343
  %v1345 = vrot.slane %v1025, %v1344
  %v1346 = vlaneseq
  %v1347 = vshrl.u32 %v1346, 7
  %v1348 = vsub.s32 1, %v1347
  %v1349 = vrot.slane %v1029, %v1348
  %v1350 = vlaneseq
  %v1351 = vshrl.u32 %v1350, 7
  %v1352 = vsub.s32 1, %v1351
  %v1353 = vrot.slane %v1033, %v1352
  %v1354 = vlaneseq
  %v1355 = vshrl.u32 %v1354, 7
  %v1356 = vsub.s32 1, %v1355
  %v1357 = vrot.slane %v1037, %v1356
  %v1358 = vlaneseq
  %v1359 = vshrl.u32 %v1358, 7
  %v1360 = vsub.s32 1, %v1359
  %v1361 = vrot.slane %v1041, %v1360
  %v1362 = vlaneseq
  %v1363 = vshrl.u32 %v1362, 7
  %v1364 = vsub.s32 1, %v1363
  %v1365 = vrot.slane %v1045, %v1364
  %v1366 = vlaneseq
  %v1367 = vshrl.u32 %v1366, 7
  %v1368 = vsub.s32 1, %v1367
  %v1369 = vrot.slane %v1049, %v1368
  %v1370 = vlaneseq
  %v1371 = vshrl.u32 %v1370, 7
  %v1372 = vsub.s32 1, %v1371
  %v1373 = vrot.slane %v1053, %v1372
  %v1374 = vmul.f32 %v796, %v1121
  %v1375 = vmul.f32 %v796, %v1125
  %v1376 = vmul.f32 %v796, %v1129
  %v1377 = vmul.f32 %v796, %v1133
  %v1378 = vmul.f32 %v796, %v1137
  %v1379 = vmul.f32 %v796, %v1141
  %v1380 = vmul.f32 %v796, %v1145
  %v1381 = vmul.f32 %v796, %v1149
  %v1382 = vmul.f32 %v796, %v1153
  %v1383 = vmul.f32 %v796, %v1157
  %v1384 = vmul.f32 %v796, %v1161
  %v1385 = vmul.f32 %v796, %v1165
  %v1386 = vmul.f32 %v796, %v1169
  %v1387 = vmul.f32 %v796, %v1173
  %v1388 = vmul.f32 %v796, %v1177
  %v1389 = vmul.f32 %v796, %v1181
  %v1390 = vmul.f32 %v796, %v1185
  %v1391 = vmul.f32 %v796, %v1189
  %v1392 = vmul.f32 %v796, %v1193
  %v1393 = vmul.f32 %v796, %v1197
  %v1394 = vmul.f32 %v796, %v1201
  %v1395 = vmul.f32 %v796, %v1205
  %v1396 = vmul.f32 %v796, %v1209
  %v1397 = vmul.f32 %v796, %v1213
  %v1398 = vmul.f32 %v796, %v1217
  %v1399 = vmul.f32 %v796, %v1221
  %v1400 = vmul.f32 %v796, %v1225
  %v1401 = vmul.f32 %v796, %v1229
  %v1402 = vmul.f32 %v796, %v1233
  %v1403 = vmul.f32 %v796, %v1237
  %v1404 = vmul.f32 %v796, %v1241
  %v1405 = vmul.f32 %v796, %v1245
  %v1406 = vmul.f32 %v796, %v1249
  %v1407 = vmul.f32 %v796, %v1253
  %v1408 = vmul.f32 %v796, %v1257
  %v1409 = vmul.f32 %v796, %v1261
  %v1410 = vmul.f32 %v796, %v1265
  %v1411 = vmul.f32 %v796, %v1269
  %v1412 = vmul.f32 %v796, %v1273
  %v1413 = vmul.f32 %v796, %v1277
  %v1414 = vmul.f32 %v796, %v1281
  %v1415 = vmul.f32 %v796, %v1285
  %v1416 = vmul.f32 %v796, %v1289
  %v1417 = vmul.f32 %v796, %v1293
  %v1418 = vmul.f32 %v796, %v1297
  %v1419 = vmul.f32 %v796, %v1301
  %v1420 = vmul.f32 %v796, %v1305
  %v1421 = vmul.f32 %v796, %v1309
  %v1422 = vmul.f32 %v796, %v1313
  %v1423 = vmul.f32 %v796, %v1317
  %v1424 = vmul.f32 %v796, %v1321
  %v1425 = vmul.f32 %v796, %v1325
  %v1426 = vmul.f32 %v796, %v1329
  %v1427 = vmul.f32 %v796, %v1333
  %v1428 = vmul.f32 %v796, %v1337
  %v1429 = vmul.f32 %v796, %v1341
  %v1430 = vmul.f32 %v796, %v1345
  %v1431 = vmul.f32 %v796, %v1349
  %v1432 = vmul.f32 %v796, %v1353
  %v1433 = vmul.f32 %v796, %v1357
  %v1434 = vmul.f32 %v796, %v1361
  %v1435 = vmul.f32 %v796, %v1365
  %v1436 = vmul.f32 %v796, %v1369
  %v1437 = vmul.f32 %v796, %v1373
  %v1438 = vadd.f32 %v730, %v1374
  %v1439 = vadd.f32 %v731, %v1375
  %v1440 = vadd.f32 %v732, %v1376
  %v1441 = vadd.f32 %v733, %v1377
  %v1442 = vadd.f32 %v734, %v1378
  %v1443 = vadd.f32 %v735, %v1379
  %v1444 = vadd.f32 %v736, %v1380
  %v1445 = vadd.f32 %v737, %v1381
  %v1446 = vadd.f32 %v738, %v1382
  %v1447 = vadd.f32 %v739, %v1383
  %v1448 = vadd.f32 %v740, %v1384
  %v1449 = vadd.f32 %v741, %v1385
  %v1450 = vadd.f32 %v742, %v1386
  %v1451 = vadd.f32 %v743, %v1387
  %v1452 = vadd.f32 %v744, %v1388
  %v1453 = vadd.f32 %v745, %v1389
  %v1454 = vadd.f32 %v746, %v1390
  %v1455 = vadd.f32 %v747, %v1391
  %v1456 = vadd.f32 %v748, %v1392
  %v1457 = vadd.f32 %v749, %v1393
  %v1458 = vadd.f32 %v750, %v1394
  %v1459 = vadd.f32 %v751, %v1395
  %v1460 = vadd.f32 %v752, %v1396
  %v1461 = vadd.f32 %v753, %v1397
  %v1462 = vadd.f32 %v754, %v1398
  %v1463 = vadd.f32 %v755, %v1399
  %v1464 = vadd.f32 %v756, %v1400
  %v1465 = vadd.f32 %v757, %v1401
  %v1466 = vadd.f32 %v758, %v1402
  %v1467 = vadd.f32 %v759, %v1403
  %v1468 = vadd.f32 %v760, %v1404
  %v1469 = vadd.f32 %v761, %v1405
  %v1470 = vadd.f32 %v762, %v1406
  %v1471 = vadd.f32 %v763, %v1407
  %v1472 = vadd.f32 %v764, %v1408
  %v1473 = vadd.f32 %v765, %v1409
  %v1474 = vadd.f32 %v766, %v1410
  %v1475 = vadd.f32 %v767, %v1411
  %v1476 = vadd.f32 %v768, %v1412
  %v1477 = vadd.f32 %v769, %v1413
  %v1478 = vadd.f32 %v770, %v1414
  %v1479 = vadd.f32 %v771, %v1415
  %v1480 = vadd.f32 %v772, %v1416
  %v1481 = vadd.f32 %v773, %v1417
  %v1482 = vadd.f32 %v774, %v1418
  %v1483 = vadd.f32 %v775, %v1419
  %v1484 = vadd.f32 %v776, %v1420
  %v1485 = vadd.f32 %v777, %v1421
  %v1486 = vadd.f32 %v778, %v1422
  %v1487 = vadd.f32 %v779, %v1423
  %v1488 = vadd.f32 %v780, %v1424
  %v1489 = vadd.f32 %v781, %v1425
  %v1490 = vadd.f32 %v782, %v1426
  %v1491 = vadd.f32 %v783, %v1427
  %v1492 = vadd.f32 %v784, %v1428
  %v1493 = vadd.f32 %v785, %v1429
  %v1494 = vadd.f32 %v786, %v1430
  %v1495 = vadd.f32 %v787, %v1431
  %v1496 = vadd.f32 %v788, %v1432
  %v1497 = vadd.f32 %v789, %v1433
  %v1498 = vadd.f32 %v790, %v1434
  %v1499 = vadd.f32 %v791, %v1435
  %v1500 = vadd.f32 %v792, %v1436
  %v1501 = vadd.f32 %v793, %v1437
  %1502 = vset.pattern.permute.xlu0 2
  %1503 = vperm.xlu0 %1502, %v14
  %v1504 = vpop.permute.xlu0 %1503
  %v1506 = vlaneseq
  %v1507 = vshrl.u32 %v1506, 7
  %v1508 = vsub.s32 2, %v1507
  %v1509 = vrot.slane %v15, %v1508
  %v1510 = vlaneseq
  %v1511 = vshrl.u32 %v1510, 7
  %v1512 = vsub.s32 6, %v1511
  %v1513 = vrot.slane %v15, %v1512
  %v1514 = vlaneseq
  %v1515 = vshrl.u32 %v1514, 7
  %v1516 = vsub.s32 2, %v1515
  %v1517 = vrot.slane %v16, %v1516
  %v1518 = vlaneseq
  %v1519 = vshrl.u32 %v1518, 7
  %v1520 = vsub.s32 6, %v1519
  %v1521 = vrot.slane %v16, %v1520
  %v1522 = vlaneseq
  %v1523 = vshrl.u32 %v1522, 7
  %v1524 = vsub.s32 2, %v1523
  %v1525 = vrot.slane %v17, %v1524
  %v1526 = vlaneseq
  %v1527 = vshrl.u32 %v1526, 7
  %v1528 = vsub.s32 6, %v1527
  %v1529 = vrot.slane %v17, %v1528
  %v1530 = vlaneseq
  %v1531 = vshrl.u32 %v1530, 7
  %v1532 = vsub.s32 2, %v1531
  %v1533 = vrot.slane %v18, %v1532
  %v1534 = vlaneseq
  %v1535 = vshrl.u32 %v1534, 7
  %v1536 = vsub.s32 6, %v1535
  %v1537 = vrot.slane %v18, %v1536
  %v1538 = vlaneseq
  %v1539 = vshrl.u32 %v1538, 7
  %v1540 = vsub.s32 2, %v1539
  %v1541 = vrot.slane %v19, %v1540
  %v1542 = vlaneseq
  %v1543 = vshrl.u32 %v1542, 7
  %v1544 = vsub.s32 6, %v1543
  %v1545 = vrot.slane %v19, %v1544
  %v1546 = vlaneseq
  %v1547 = vshrl.u32 %v1546, 7
  %v1548 = vsub.s32 2, %v1547
  %v1549 = vrot.slane %v20, %v1548
  %v1550 = vlaneseq
  %v1551 = vshrl.u32 %v1550, 7
  %v1552 = vsub.s32 6, %v1551
  %v1553 = vrot.slane %v20, %v1552
  %v1554 = vlaneseq
  %v1555 = vshrl.u32 %v1554, 7
  %v1556 = vsub.s32 2, %v1555
  %v1557 = vrot.slane %v21, %v1556
  %v1558 = vlaneseq
  %v1559 = vshrl.u32 %v1558, 7
  %v1560 = vsub.s32 6, %v1559
  %v1561 = vrot.slane %v21, %v1560
  %v1562 = vlaneseq
  %v1563 = vshrl.u32 %v1562, 7
  %v1564 = vsub.s32 2, %v1563
  %v1565 = vrot.slane %v22, %v1564
  %v1566 = vlaneseq
  %v1567 = vshrl.u32 %v1566, 7
  %v1568 = vsub.s32 6, %v1567
  %v1569 = vrot.slane %v22, %v1568
  %v1570 = vlaneseq
  %v1571 = vshrl.u32 %v1570, 7
  %v1572 = vsub.s32 2, %v1571
  %v1573 = vrot.slane %v23, %v1572
  %v1574 = vlaneseq
  %v1575 = vshrl.u32 %v1574, 7
  %v1576 = vsub.s32 6, %v1575
  %v1577 = vrot.slane %v23, %v1576
  %v1578 = vlaneseq
  %v1579 = vshrl.u32 %v1578, 7
  %v1580 = vsub.s32 2, %v1579
  %v1581 = vrot.slane %v24, %v1580
  %v1582 = vlaneseq
  %v1583 = vshrl.u32 %v1582, 7
  %v1584 = vsub.s32 6, %v1583
  %v1585 = vrot.slane %v24, %v1584
  %v1586 = vlaneseq
  %v1587 = vshrl.u32 %v1586, 7
  %v1588 = vsub.s32 2, %v1587
  %v1589 = vrot.slane %v25, %v1588
  %v1590 = vlaneseq
  %v1591 = vshrl.u32 %v1590, 7
  %v1592 = vsub.s32 6, %v1591
  %v1593 = vrot.slane %v25, %v1592
  %v1594 = vlaneseq
  %v1595 = vshrl.u32 %v1594, 7
  %v1596 = vsub.s32 2, %v1595
  %v1597 = vrot.slane %v26, %v1596
  %v1598 = vlaneseq
  %v1599 = vshrl.u32 %v1598, 7
  %v1600 = vsub.s32 6, %v1599
  %v1601 = vrot.slane %v26, %v1600
  %v1602 = vlaneseq
  %v1603 = vshrl.u32 %v1602, 7
  %v1604 = vsub.s32 2, %v1603
  %v1605 = vrot.slane %v27, %v1604
  %v1606 = vlaneseq
  %v1607 = vshrl.u32 %v1606, 7
  %v1608 = vsub.s32 6, %v1607
  %v1609 = vrot.slane %v27, %v1608
  %v1610 = vlaneseq
  %v1611 = vshrl.u32 %v1610, 7
  %v1612 = vsub.s32 2, %v1611
  %v1613 = vrot.slane %v28, %v1612
  %v1614 = vlaneseq
  %v1615 = vshrl.u32 %v1614, 7
  %v1616 = vsub.s32 6, %v1615
  %v1617 = vrot.slane %v28, %v1616
  %v1618 = vlaneseq
  %v1619 = vshrl.u32 %v1618, 7
  %v1620 = vsub.s32 2, %v1619
  %v1621 = vrot.slane %v29, %v1620
  %v1622 = vlaneseq
  %v1623 = vshrl.u32 %v1622, 7
  %v1624 = vsub.s32 6, %v1623
  %v1625 = vrot.slane %v29, %v1624
  %v1626 = vlaneseq
  %v1627 = vshrl.u32 %v1626, 7
  %v1628 = vsub.s32 2, %v1627
  %v1629 = vrot.slane %v30, %v1628
  %v1630 = vlaneseq
  %v1631 = vshrl.u32 %v1630, 7
  %v1632 = vsub.s32 6, %v1631
  %v1633 = vrot.slane %v30, %v1632
  %v1634 = vlaneseq
  %v1635 = vshrl.u32 %v1634, 7
  %v1636 = vsub.s32 2, %v1635
  %v1637 = vrot.slane %v31, %v1636
  %v1638 = vlaneseq
  %v1639 = vshrl.u32 %v1638, 7
  %v1640 = vsub.s32 6, %v1639
  %v1641 = vrot.slane %v31, %v1640
  %v1642 = vlaneseq
  %v1643 = vshrl.u32 %v1642, 7
  %v1644 = vsub.s32 2, %v1643
  %v1645 = vrot.slane %v32, %v1644
  %v1646 = vlaneseq
  %v1647 = vshrl.u32 %v1646, 7
  %v1648 = vsub.s32 6, %v1647
  %v1649 = vrot.slane %v32, %v1648
  %v1650 = vlaneseq
  %v1651 = vshrl.u32 %v1650, 7
  %v1652 = vsub.s32 2, %v1651
  %v1653 = vrot.slane %v33, %v1652
  %v1654 = vlaneseq
  %v1655 = vshrl.u32 %v1654, 7
  %v1656 = vsub.s32 6, %v1655
  %v1657 = vrot.slane %v33, %v1656
  %v1658 = vlaneseq
  %v1659 = vshrl.u32 %v1658, 7
  %v1660 = vsub.s32 2, %v1659
  %v1661 = vrot.slane %v34, %v1660
  %v1662 = vlaneseq
  %v1663 = vshrl.u32 %v1662, 7
  %v1664 = vsub.s32 6, %v1663
  %v1665 = vrot.slane %v34, %v1664
  %v1666 = vlaneseq
  %v1667 = vshrl.u32 %v1666, 7
  %v1668 = vsub.s32 2, %v1667
  %v1669 = vrot.slane %v35, %v1668
  %v1670 = vlaneseq
  %v1671 = vshrl.u32 %v1670, 7
  %v1672 = vsub.s32 6, %v1671
  %v1673 = vrot.slane %v35, %v1672
  %v1674 = vlaneseq
  %v1675 = vshrl.u32 %v1674, 7
  %v1676 = vsub.s32 2, %v1675
  %v1677 = vrot.slane %v36, %v1676
  %v1678 = vlaneseq
  %v1679 = vshrl.u32 %v1678, 7
  %v1680 = vsub.s32 6, %v1679
  %v1681 = vrot.slane %v36, %v1680
  %v1682 = vlaneseq
  %v1683 = vshrl.u32 %v1682, 7
  %v1684 = vsub.s32 2, %v1683
  %v1685 = vrot.slane %v37, %v1684
  %v1686 = vlaneseq
  %v1687 = vshrl.u32 %v1686, 7
  %v1688 = vsub.s32 6, %v1687
  %v1689 = vrot.slane %v37, %v1688
  %v1690 = vlaneseq
  %v1691 = vshrl.u32 %v1690, 7
  %v1692 = vsub.s32 2, %v1691
  %v1693 = vrot.slane %v38, %v1692
  %v1694 = vlaneseq
  %v1695 = vshrl.u32 %v1694, 7
  %v1696 = vsub.s32 6, %v1695
  %v1697 = vrot.slane %v38, %v1696
  %v1698 = vlaneseq
  %v1699 = vshrl.u32 %v1698, 7
  %v1700 = vsub.s32 2, %v1699
  %v1701 = vrot.slane %v39, %v1700
  %v1702 = vlaneseq
  %v1703 = vshrl.u32 %v1702, 7
  %v1704 = vsub.s32 6, %v1703
  %v1705 = vrot.slane %v39, %v1704
  %v1706 = vlaneseq
  %v1707 = vshrl.u32 %v1706, 7
  %v1708 = vsub.s32 2, %v1707
  %v1709 = vrot.slane %v40, %v1708
  %v1710 = vlaneseq
  %v1711 = vshrl.u32 %v1710, 7
  %v1712 = vsub.s32 6, %v1711
  %v1713 = vrot.slane %v40, %v1712
  %v1714 = vlaneseq
  %v1715 = vshrl.u32 %v1714, 7
  %v1716 = vsub.s32 2, %v1715
  %v1717 = vrot.slane %v41, %v1716
  %v1718 = vlaneseq
  %v1719 = vshrl.u32 %v1718, 7
  %v1720 = vsub.s32 6, %v1719
  %v1721 = vrot.slane %v41, %v1720
  %v1722 = vlaneseq
  %v1723 = vshrl.u32 %v1722, 7
  %v1724 = vsub.s32 2, %v1723
  %v1725 = vrot.slane %v42, %v1724
  %v1726 = vlaneseq
  %v1727 = vshrl.u32 %v1726, 7
  %v1728 = vsub.s32 6, %v1727
  %v1729 = vrot.slane %v42, %v1728
  %v1730 = vlaneseq
  %v1731 = vshrl.u32 %v1730, 7
  %v1732 = vsub.s32 2, %v1731
  %v1733 = vrot.slane %v43, %v1732
  %v1734 = vlaneseq
  %v1735 = vshrl.u32 %v1734, 7
  %v1736 = vsub.s32 6, %v1735
  %v1737 = vrot.slane %v43, %v1736
  %v1738 = vlaneseq
  %v1739 = vshrl.u32 %v1738, 7
  %v1740 = vsub.s32 2, %v1739
  %v1741 = vrot.slane %v44, %v1740
  %v1742 = vlaneseq
  %v1743 = vshrl.u32 %v1742, 7
  %v1744 = vsub.s32 6, %v1743
  %v1745 = vrot.slane %v44, %v1744
  %v1746 = vlaneseq
  %v1747 = vshrl.u32 %v1746, 7
  %v1748 = vsub.s32 2, %v1747
  %v1749 = vrot.slane %v45, %v1748
  %v1750 = vlaneseq
  %v1751 = vshrl.u32 %v1750, 7
  %v1752 = vsub.s32 6, %v1751
  %v1753 = vrot.slane %v45, %v1752
  %v1754 = vlaneseq
  %v1755 = vshrl.u32 %v1754, 7
  %v1756 = vsub.s32 2, %v1755
  %v1757 = vrot.slane %v46, %v1756
  %v1758 = vlaneseq
  %v1759 = vshrl.u32 %v1758, 7
  %v1760 = vsub.s32 6, %v1759
  %v1761 = vrot.slane %v46, %v1760
  %v1826 = vlaneseq
  %v1827 = vshrl.u32 %v1826, 7
  %v1828 = vsub.s32 2, %v1827
  %v1829 = vrot.slane %v1509, %v1828
  %v1830 = vlaneseq
  %v1831 = vshrl.u32 %v1830, 7
  %v1832 = vsub.s32 2, %v1831
  %v1833 = vrot.slane %v1513, %v1832
  %v1834 = vlaneseq
  %v1835 = vshrl.u32 %v1834, 7
  %v1836 = vsub.s32 2, %v1835
  %v1837 = vrot.slane %v1517, %v1836
  %v1838 = vlaneseq
  %v1839 = vshrl.u32 %v1838, 7
  %v1840 = vsub.s32 2, %v1839
  %v1841 = vrot.slane %v1521, %v1840
  %v1842 = vlaneseq
  %v1843 = vshrl.u32 %v1842, 7
  %v1844 = vsub.s32 2, %v1843
  %v1845 = vrot.slane %v1525, %v1844
  %v1846 = vlaneseq
  %v1847 = vshrl.u32 %v1846, 7
  %v1848 = vsub.s32 2, %v1847
  %v1849 = vrot.slane %v1529, %v1848
  %v1850 = vlaneseq
  %v1851 = vshrl.u32 %v1850, 7
  %v1852 = vsub.s32 2, %v1851
  %v1853 = vrot.slane %v1533, %v1852
  %v1854 = vlaneseq
  %v1855 = vshrl.u32 %v1854, 7
  %v1856 = vsub.s32 2, %v1855
  %v1857 = vrot.slane %v1537, %v1856
  %v1858 = vlaneseq
  %v1859 = vshrl.u32 %v1858, 7
  %v1860 = vsub.s32 2, %v1859
  %v1861 = vrot.slane %v1541, %v1860
  %v1862 = vlaneseq
  %v1863 = vshrl.u32 %v1862, 7
  %v1864 = vsub.s32 2, %v1863
  %v1865 = vrot.slane %v1545, %v1864
  %v1866 = vlaneseq
  %v1867 = vshrl.u32 %v1866, 7
  %v1868 = vsub.s32 2, %v1867
  %v1869 = vrot.slane %v1549, %v1868
  %v1870 = vlaneseq
  %v1871 = vshrl.u32 %v1870, 7
  %v1872 = vsub.s32 2, %v1871
  %v1873 = vrot.slane %v1553, %v1872
  %v1874 = vlaneseq
  %v1875 = vshrl.u32 %v1874, 7
  %v1876 = vsub.s32 2, %v1875
  %v1877 = vrot.slane %v1557, %v1876
  %v1878 = vlaneseq
  %v1879 = vshrl.u32 %v1878, 7
  %v1880 = vsub.s32 2, %v1879
  %v1881 = vrot.slane %v1561, %v1880
  %v1882 = vlaneseq
  %v1883 = vshrl.u32 %v1882, 7
  %v1884 = vsub.s32 2, %v1883
  %v1885 = vrot.slane %v1565, %v1884
  %v1886 = vlaneseq
  %v1887 = vshrl.u32 %v1886, 7
  %v1888 = vsub.s32 2, %v1887
  %v1889 = vrot.slane %v1569, %v1888
  %v1890 = vlaneseq
  %v1891 = vshrl.u32 %v1890, 7
  %v1892 = vsub.s32 2, %v1891
  %v1893 = vrot.slane %v1573, %v1892
  %v1894 = vlaneseq
  %v1895 = vshrl.u32 %v1894, 7
  %v1896 = vsub.s32 2, %v1895
  %v1897 = vrot.slane %v1577, %v1896
  %v1898 = vlaneseq
  %v1899 = vshrl.u32 %v1898, 7
  %v1900 = vsub.s32 2, %v1899
  %v1901 = vrot.slane %v1581, %v1900
  %v1902 = vlaneseq
  %v1903 = vshrl.u32 %v1902, 7
  %v1904 = vsub.s32 2, %v1903
  %v1905 = vrot.slane %v1585, %v1904
  %v1906 = vlaneseq
  %v1907 = vshrl.u32 %v1906, 7
  %v1908 = vsub.s32 2, %v1907
  %v1909 = vrot.slane %v1589, %v1908
  %v1910 = vlaneseq
  %v1911 = vshrl.u32 %v1910, 7
  %v1912 = vsub.s32 2, %v1911
  %v1913 = vrot.slane %v1593, %v1912
  %v1914 = vlaneseq
  %v1915 = vshrl.u32 %v1914, 7
  %v1916 = vsub.s32 2, %v1915
  %v1917 = vrot.slane %v1597, %v1916
  %v1918 = vlaneseq
  %v1919 = vshrl.u32 %v1918, 7
  %v1920 = vsub.s32 2, %v1919
  %v1921 = vrot.slane %v1601, %v1920
  %v1922 = vlaneseq
  %v1923 = vshrl.u32 %v1922, 7
  %v1924 = vsub.s32 2, %v1923
  %v1925 = vrot.slane %v1605, %v1924
  %v1926 = vlaneseq
  %v1927 = vshrl.u32 %v1926, 7
  %v1928 = vsub.s32 2, %v1927
  %v1929 = vrot.slane %v1609, %v1928
  %v1930 = vlaneseq
  %v1931 = vshrl.u32 %v1930, 7
  %v1932 = vsub.s32 2, %v1931
  %v1933 = vrot.slane %v1613, %v1932
  %v1934 = vlaneseq
  %v1935 = vshrl.u32 %v1934, 7
  %v1936 = vsub.s32 2, %v1935
  %v1937 = vrot.slane %v1617, %v1936
  %v1938 = vlaneseq
  %v1939 = vshrl.u32 %v1938, 7
  %v1940 = vsub.s32 2, %v1939
  %v1941 = vrot.slane %v1621, %v1940
  %v1942 = vlaneseq
  %v1943 = vshrl.u32 %v1942, 7
  %v1944 = vsub.s32 2, %v1943
  %v1945 = vrot.slane %v1625, %v1944
  %v1946 = vlaneseq
  %v1947 = vshrl.u32 %v1946, 7
  %v1948 = vsub.s32 2, %v1947
  %v1949 = vrot.slane %v1629, %v1948
  %v1950 = vlaneseq
  %v1951 = vshrl.u32 %v1950, 7
  %v1952 = vsub.s32 2, %v1951
  %v1953 = vrot.slane %v1633, %v1952
  %v1954 = vlaneseq
  %v1955 = vshrl.u32 %v1954, 7
  %v1956 = vsub.s32 2, %v1955
  %v1957 = vrot.slane %v1637, %v1956
  %v1958 = vlaneseq
  %v1959 = vshrl.u32 %v1958, 7
  %v1960 = vsub.s32 2, %v1959
  %v1961 = vrot.slane %v1641, %v1960
  %v1962 = vlaneseq
  %v1963 = vshrl.u32 %v1962, 7
  %v1964 = vsub.s32 2, %v1963
  %v1965 = vrot.slane %v1645, %v1964
  %v1966 = vlaneseq
  %v1967 = vshrl.u32 %v1966, 7
  %v1968 = vsub.s32 2, %v1967
  %v1969 = vrot.slane %v1649, %v1968
  %v1970 = vlaneseq
  %v1971 = vshrl.u32 %v1970, 7
  %v1972 = vsub.s32 2, %v1971
  %v1973 = vrot.slane %v1653, %v1972
  %v1974 = vlaneseq
  %v1975 = vshrl.u32 %v1974, 7
  %v1976 = vsub.s32 2, %v1975
  %v1977 = vrot.slane %v1657, %v1976
  %v1978 = vlaneseq
  %v1979 = vshrl.u32 %v1978, 7
  %v1980 = vsub.s32 2, %v1979
  %v1981 = vrot.slane %v1661, %v1980
  %v1982 = vlaneseq
  %v1983 = vshrl.u32 %v1982, 7
  %v1984 = vsub.s32 2, %v1983
  %v1985 = vrot.slane %v1665, %v1984
  %v1986 = vlaneseq
  %v1987 = vshrl.u32 %v1986, 7
  %v1988 = vsub.s32 2, %v1987
  %v1989 = vrot.slane %v1669, %v1988
  %v1990 = vlaneseq
  %v1991 = vshrl.u32 %v1990, 7
  %v1992 = vsub.s32 2, %v1991
  %v1993 = vrot.slane %v1673, %v1992
  %v1994 = vlaneseq
  %v1995 = vshrl.u32 %v1994, 7
  %v1996 = vsub.s32 2, %v1995
  %v1997 = vrot.slane %v1677, %v1996
  %v1998 = vlaneseq
  %v1999 = vshrl.u32 %v1998, 7
  %v2000 = vsub.s32 2, %v1999
  %v2001 = vrot.slane %v1681, %v2000
  %v2002 = vlaneseq
  %v2003 = vshrl.u32 %v2002, 7
  %v2004 = vsub.s32 2, %v2003
  %v2005 = vrot.slane %v1685, %v2004
  %v2006 = vlaneseq
  %v2007 = vshrl.u32 %v2006, 7
  %v2008 = vsub.s32 2, %v2007
  %v2009 = vrot.slane %v1689, %v2008
  %v2010 = vlaneseq
  %v2011 = vshrl.u32 %v2010, 7
  %v2012 = vsub.s32 2, %v2011
  %v2013 = vrot.slane %v1693, %v2012
  %v2014 = vlaneseq
  %v2015 = vshrl.u32 %v2014, 7
  %v2016 = vsub.s32 2, %v2015
  %v2017 = vrot.slane %v1697, %v2016
  %v2018 = vlaneseq
  %v2019 = vshrl.u32 %v2018, 7
  %v2020 = vsub.s32 2, %v2019
  %v2021 = vrot.slane %v1701, %v2020
  %v2022 = vlaneseq
  %v2023 = vshrl.u32 %v2022, 7
  %v2024 = vsub.s32 2, %v2023
  %v2025 = vrot.slane %v1705, %v2024
  %v2026 = vlaneseq
  %v2027 = vshrl.u32 %v2026, 7
  %v2028 = vsub.s32 2, %v2027
  %v2029 = vrot.slane %v1709, %v2028
  %v2030 = vlaneseq
  %v2031 = vshrl.u32 %v2030, 7
  %v2032 = vsub.s32 2, %v2031
  %v2033 = vrot.slane %v1713, %v2032
  %v2034 = vlaneseq
  %v2035 = vshrl.u32 %v2034, 7
  %v2036 = vsub.s32 2, %v2035
  %v2037 = vrot.slane %v1717, %v2036
  %v2038 = vlaneseq
  %v2039 = vshrl.u32 %v2038, 7
  %v2040 = vsub.s32 2, %v2039
  %v2041 = vrot.slane %v1721, %v2040
  %v2042 = vlaneseq
  %v2043 = vshrl.u32 %v2042, 7
  %v2044 = vsub.s32 2, %v2043
  %v2045 = vrot.slane %v1725, %v2044
  %v2046 = vlaneseq
  %v2047 = vshrl.u32 %v2046, 7
  %v2048 = vsub.s32 2, %v2047
  %v2049 = vrot.slane %v1729, %v2048
  %v2050 = vlaneseq
  %v2051 = vshrl.u32 %v2050, 7
  %v2052 = vsub.s32 2, %v2051
  %v2053 = vrot.slane %v1733, %v2052
  %v2054 = vlaneseq
  %v2055 = vshrl.u32 %v2054, 7
  %v2056 = vsub.s32 2, %v2055
  %v2057 = vrot.slane %v1737, %v2056
  %v2058 = vlaneseq
  %v2059 = vshrl.u32 %v2058, 7
  %v2060 = vsub.s32 2, %v2059
  %v2061 = vrot.slane %v1741, %v2060
  %v2062 = vlaneseq
  %v2063 = vshrl.u32 %v2062, 7
  %v2064 = vsub.s32 2, %v2063
  %v2065 = vrot.slane %v1745, %v2064
  %v2066 = vlaneseq
  %v2067 = vshrl.u32 %v2066, 7
  %v2068 = vsub.s32 2, %v2067
  %v2069 = vrot.slane %v1749, %v2068
  %v2070 = vlaneseq
  %v2071 = vshrl.u32 %v2070, 7
  %v2072 = vsub.s32 2, %v2071
  %v2073 = vrot.slane %v1753, %v2072
  %v2074 = vlaneseq
  %v2075 = vshrl.u32 %v2074, 7
  %v2076 = vsub.s32 2, %v2075
  %v2077 = vrot.slane %v1757, %v2076
  %v2078 = vlaneseq
  %v2079 = vshrl.u32 %v2078, 7
  %v2080 = vsub.s32 2, %v2079
  %v2081 = vrot.slane %v1761, %v2080
  %v2082 = vmul.f32 %v1504, %v1829
  %v2083 = vmul.f32 %v1504, %v1833
  %v2084 = vmul.f32 %v1504, %v1837
  %v2085 = vmul.f32 %v1504, %v1841
  %v2086 = vmul.f32 %v1504, %v1845
  %v2087 = vmul.f32 %v1504, %v1849
  %v2088 = vmul.f32 %v1504, %v1853
  %v2089 = vmul.f32 %v1504, %v1857
  %v2090 = vmul.f32 %v1504, %v1861
  %v2091 = vmul.f32 %v1504, %v1865
  %v2092 = vmul.f32 %v1504, %v1869
  %v2093 = vmul.f32 %v1504, %v1873
  %v2094 = vmul.f32 %v1504, %v1877
  %v2095 = vmul.f32 %v1504, %v1881
  %v2096 = vmul.f32 %v1504, %v1885
  %v2097 = vmul.f32 %v1504, %v1889
  %v2098 = vmul.f32 %v1504, %v1893
  %v2099 = vmul.f32 %v1504, %v1897
  %v2100 = vmul.f32 %v1504, %v1901
  %v2101 = vmul.f32 %v1504, %v1905
  %v2102 = vmul.f32 %v1504, %v1909
  %v2103 = vmul.f32 %v1504, %v1913
  %v2104 = vmul.f32 %v1504, %v1917
  %v2105 = vmul.f32 %v1504, %v1921
  %v2106 = vmul.f32 %v1504, %v1925
  %v2107 = vmul.f32 %v1504, %v1929
  %v2108 = vmul.f32 %v1504, %v1933
  %v2109 = vmul.f32 %v1504, %v1937
  %v2110 = vmul.f32 %v1504, %v1941
  %v2111 = vmul.f32 %v1504, %v1945
  %v2112 = vmul.f32 %v1504, %v1949
  %v2113 = vmul.f32 %v1504, %v1953
  %v2114 = vmul.f32 %v1504, %v1957
  %v2115 = vmul.f32 %v1504, %v1961
  %v2116 = vmul.f32 %v1504, %v1965
  %v2117 = vmul.f32 %v1504, %v1969
  %v2118 = vmul.f32 %v1504, %v1973
  %v2119 = vmul.f32 %v1504, %v1977
  %v2120 = vmul.f32 %v1504, %v1981
  %v2121 = vmul.f32 %v1504, %v1985
  %v2122 = vmul.f32 %v1504, %v1989
  %v2123 = vmul.f32 %v1504, %v1993
  %v2124 = vmul.f32 %v1504, %v1997
  %v2125 = vmul.f32 %v1504, %v2001
  %v2126 = vmul.f32 %v1504, %v2005
  %v2127 = vmul.f32 %v1504, %v2009
  %v2128 = vmul.f32 %v1504, %v2013
  %v2129 = vmul.f32 %v1504, %v2017
  %v2130 = vmul.f32 %v1504, %v2021
  %v2131 = vmul.f32 %v1504, %v2025
  %v2132 = vmul.f32 %v1504, %v2029
  %v2133 = vmul.f32 %v1504, %v2033
  %v2134 = vmul.f32 %v1504, %v2037
  %v2135 = vmul.f32 %v1504, %v2041
  %v2136 = vmul.f32 %v1504, %v2045
  %v2137 = vmul.f32 %v1504, %v2049
  %v2138 = vmul.f32 %v1504, %v2053
  %v2139 = vmul.f32 %v1504, %v2057
  %v2140 = vmul.f32 %v1504, %v2061
  %v2141 = vmul.f32 %v1504, %v2065
  %v2142 = vmul.f32 %v1504, %v2069
  %v2143 = vmul.f32 %v1504, %v2073
  %v2144 = vmul.f32 %v1504, %v2077
  %v2145 = vmul.f32 %v1504, %v2081
  %v2146 = vadd.f32 %v1438, %v2082
  %v2147 = vadd.f32 %v1439, %v2083
  %v2148 = vadd.f32 %v1440, %v2084
  %v2149 = vadd.f32 %v1441, %v2085
  %v2150 = vadd.f32 %v1442, %v2086
  %v2151 = vadd.f32 %v1443, %v2087
  %v2152 = vadd.f32 %v1444, %v2088
  %v2153 = vadd.f32 %v1445, %v2089
  %v2154 = vadd.f32 %v1446, %v2090
  %v2155 = vadd.f32 %v1447, %v2091
  %v2156 = vadd.f32 %v1448, %v2092
  %v2157 = vadd.f32 %v1449, %v2093
  %v2158 = vadd.f32 %v1450, %v2094
  %v2159 = vadd.f32 %v1451, %v2095
  %v2160 = vadd.f32 %v1452, %v2096
  %v2161 = vadd.f32 %v1453, %v2097
  %v2162 = vadd.f32 %v1454, %v2098
  %v2163 = vadd.f32 %v1455, %v2099
  %v2164 = vadd.f32 %v1456, %v2100
  %v2165 = vadd.f32 %v1457, %v2101
  %v2166 = vadd.f32 %v1458, %v2102
  %v2167 = vadd.f32 %v1459, %v2103
  %v2168 = vadd.f32 %v1460, %v2104
  %v2169 = vadd.f32 %v1461, %v2105
  %v2170 = vadd.f32 %v1462, %v2106
  %v2171 = vadd.f32 %v1463, %v2107
  %v2172 = vadd.f32 %v1464, %v2108
  %v2173 = vadd.f32 %v1465, %v2109
  %v2174 = vadd.f32 %v1466, %v2110
  %v2175 = vadd.f32 %v1467, %v2111
  %v2176 = vadd.f32 %v1468, %v2112
  %v2177 = vadd.f32 %v1469, %v2113
  %v2178 = vadd.f32 %v1470, %v2114
  %v2179 = vadd.f32 %v1471, %v2115
  %v2180 = vadd.f32 %v1472, %v2116
  %v2181 = vadd.f32 %v1473, %v2117
  %v2182 = vadd.f32 %v1474, %v2118
  %v2183 = vadd.f32 %v1475, %v2119
  %v2184 = vadd.f32 %v1476, %v2120
  %v2185 = vadd.f32 %v1477, %v2121
  %v2186 = vadd.f32 %v1478, %v2122
  %v2187 = vadd.f32 %v1479, %v2123
  %v2188 = vadd.f32 %v1480, %v2124
  %v2189 = vadd.f32 %v1481, %v2125
  %v2190 = vadd.f32 %v1482, %v2126
  %v2191 = vadd.f32 %v1483, %v2127
  %v2192 = vadd.f32 %v1484, %v2128
  %v2193 = vadd.f32 %v1485, %v2129
  %v2194 = vadd.f32 %v1486, %v2130
  %v2195 = vadd.f32 %v1487, %v2131
  %v2196 = vadd.f32 %v1488, %v2132
  %v2197 = vadd.f32 %v1489, %v2133
  %v2198 = vadd.f32 %v1490, %v2134
  %v2199 = vadd.f32 %v1491, %v2135
  %v2200 = vadd.f32 %v1492, %v2136
  %v2201 = vadd.f32 %v1493, %v2137
  %v2202 = vadd.f32 %v1494, %v2138
  %v2203 = vadd.f32 %v1495, %v2139
  %v2204 = vadd.f32 %v1496, %v2140
  %v2205 = vadd.f32 %v1497, %v2141
  %v2206 = vadd.f32 %v1498, %v2142
  %v2207 = vadd.f32 %v1499, %v2143
  %v2208 = vadd.f32 %v1500, %v2144
  %v2209 = vadd.f32 %v1501, %v2145
  %v2210 = vmax.f32 %v2146, 0.0
  %v2211 = vmax.f32 %v2147, 0.0
  %v2212 = vmax.f32 %v2148, 0.0
  %v2213 = vmax.f32 %v2149, 0.0
  %v2214 = vmax.f32 %v2150, 0.0
  %v2215 = vmax.f32 %v2151, 0.0
  %v2216 = vmax.f32 %v2152, 0.0
  %v2217 = vmax.f32 %v2153, 0.0
  %v2218 = vmax.f32 %v2154, 0.0
  %v2219 = vmax.f32 %v2155, 0.0
  %v2220 = vmax.f32 %v2156, 0.0
  %v2221 = vmax.f32 %v2157, 0.0
  %v2222 = vmax.f32 %v2158, 0.0
  %v2223 = vmax.f32 %v2159, 0.0
  %v2224 = vmax.f32 %v2160, 0.0
  %v2225 = vmax.f32 %v2161, 0.0
  %v2226 = vmax.f32 %v2162, 0.0
  %v2227 = vmax.f32 %v2163, 0.0
  %v2228 = vmax.f32 %v2164, 0.0
  %v2229 = vmax.f32 %v2165, 0.0
  %v2230 = vmax.f32 %v2166, 0.0
  %v2231 = vmax.f32 %v2167, 0.0
  %v2232 = vmax.f32 %v2168, 0.0
  %v2233 = vmax.f32 %v2169, 0.0
  %v2234 = vmax.f32 %v2170, 0.0
  %v2235 = vmax.f32 %v2171, 0.0
  %v2236 = vmax.f32 %v2172, 0.0
  %v2237 = vmax.f32 %v2173, 0.0
  %v2238 = vmax.f32 %v2174, 0.0
  %v2239 = vmax.f32 %v2175, 0.0
  %v2240 = vmax.f32 %v2176, 0.0
  %v2241 = vmax.f32 %v2177, 0.0
  %v2242 = vmax.f32 %v2178, 0.0
  %v2243 = vmax.f32 %v2179, 0.0
  %v2244 = vmax.f32 %v2180, 0.0
  %v2245 = vmax.f32 %v2181, 0.0
  %v2246 = vmax.f32 %v2182, 0.0
  %v2247 = vmax.f32 %v2183, 0.0
  %v2248 = vmax.f32 %v2184, 0.0
  %v2249 = vmax.f32 %v2185, 0.0
  %v2250 = vmax.f32 %v2186, 0.0
  %v2251 = vmax.f32 %v2187, 0.0
  %v2252 = vmax.f32 %v2188, 0.0
  %v2253 = vmax.f32 %v2189, 0.0
  %v2254 = vmax.f32 %v2190, 0.0
  %v2255 = vmax.f32 %v2191, 0.0
  %v2256 = vmax.f32 %v2192, 0.0
  %v2257 = vmax.f32 %v2193, 0.0
  %v2258 = vmax.f32 %v2194, 0.0
  %v2259 = vmax.f32 %v2195, 0.0
  %v2260 = vmax.f32 %v2196, 0.0
  %v2261 = vmax.f32 %v2197, 0.0
  %v2262 = vmax.f32 %v2198, 0.0
  %v2263 = vmax.f32 %v2199, 0.0
  %v2264 = vmax.f32 %v2200, 0.0
  %v2265 = vmax.f32 %v2201, 0.0
  %v2266 = vmax.f32 %v2202, 0.0
  %v2267 = vmax.f32 %v2203, 0.0
  %v2268 = vmax.f32 %v2204, 0.0
  %v2269 = vmax.f32 %v2205, 0.0
  %v2270 = vmax.f32 %v2206, 0.0
  %v2271 = vmax.f32 %v2207, 0.0
  %v2272 = vmax.f32 %v2208, 0.0
  %v2273 = vmax.f32 %v2209, 0.0
  %2274 = vst [vmem:[%s3] sm:$0xff] %v2210
  %2275 = vst [vmem:[%s3 + $0x8] sm:$0xff] %v2211
  %2276 = vst [vmem:[%s3 + $0x10] sm:$0xff] %v2212
  %2277 = vst [vmem:[%s3 + $0x18] sm:$0xff] %v2213
  %2278 = vst [vmem:[%s3 + $0x20] sm:$0xff] %v2214
  %2279 = vst [vmem:[%s3 + $0x28] sm:$0xff] %v2215
  %2280 = vst [vmem:[%s3 + $0x30] sm:$0xff] %v2216
  %2281 = vst [vmem:[%s3 + $0x38] sm:$0xff] %v2217
  %2282 = vst [vmem:[%s3 + $0x40] sm:$0xff] %v2218
  %2283 = vst [vmem:[%s3 + $0x48] sm:$0xff] %v2219
  %2284 = vst [vmem:[%s3 + $0x50] sm:$0xff] %v2220
  %2285 = vst [vmem:[%s3 + $0x58] sm:$0xff] %v2221
  %2286 = vst [vmem:[%s3 + $0x60] sm:$0xff] %v2222
  %2287 = vst [vmem:[%s3 + $0x68] sm:$0xff] %v2223
  %2288 = vst [vmem:[%s3 + $0x70] sm:$0xff] %v2224
  %2289 = vst [vmem:[%s3 + $0x78] sm:$0xff] %v2225
  %2290 = vst [vmem:[%s3 + $0x80] sm:$0xff] %v2226
  %2291 = vst [vmem:[%s3 + $0x88] sm:$0xff] %v2227
  %2292 = vst [vmem:[%s3 + $0x90] sm:$0xff] %v2228
  %2293 = vst [vmem:[%s3 + $0x98] sm:$0xff] %v2229
  %2294 = vst [vmem:[%s3 + $0xa0] sm:$0xff] %v2230
  %2295 = vst [vmem:[%s3 + $0xa8] sm:$0xff] %v2231
  %2296 = vst [vmem:[%s3 + $0xb0] sm:$0xff] %v2232
  %2297 = vst [vmem:[%s3 + $0xb8] sm:$0xff] %v2233
  %2298 = vst [vmem:[%s3 + $0xc0] sm:$0xff] %v2234
  %2299 = vst [vmem:[%s3 + $0xc8] sm:$0xff] %v2235
  %2300 = vst [vmem:[%s3 + $0xd0] sm:$0xff] %v2236
  %2301 = vst [vmem:[%s3 + $0xd8] sm:$0xff] %v2237
  %2302 = vst [vmem:[%s3 + $0xe0] sm:$0xff] %v2238
  %2303 = vst [vmem:[%s3 + $0xe8] sm:$0xff] %v2239
  %2304 = vst [vmem:[%s3 + $0xf0] sm:$0xff] %v2240
  %2305 = vst [vmem:[%s3 + $0xf8] sm:$0xff] %v2241
  %2306 = vst [vmem:[%s3 + $0x100] sm:$0xff] %v2242
  %2307 = vst [vmem:[%s3 + $0x108] sm:$0xff] %v2243
  %2308 = vst [vmem:[%s3 + $0x110] sm:$0xff] %v2244
  %2309 = vst [vmem:[%s3 + $0x118] sm:$0xff] %v2245
  %2310 = vst [vmem:[%s3 + $0x120] sm:$0xff] %v2246
  %2311 = vst [vmem:[%s3 + $0x128] sm:$0xff] %v2247
  %2312 = vst [vmem:[%s3 + $0x130] sm:$0xff] %v2248
  %2313 = vst [vmem:[%s3 + $0x138] sm:$0xff] %v2249
  %2314 = vst [vmem:[%s3 + $0x140] sm:$0xff] %v2250
  %2315 = vst [vmem:[%s3 + $0x148] sm:$0xff] %v2251
  %2316 = vst [vmem:[%s3 + $0x150] sm:$0xff] %v2252
  %2317 = vst [vmem:[%s3 + $0x158] sm:$0xff] %v2253
  %2318 = vst [vmem:[%s3 + $0x160] sm:$0xff] %v2254
  %2319 = vst [vmem:[%s3 + $0x168] sm:$0xff] %v2255
  %2320 = vst [vmem:[%s3 + $0x170] sm:$0xff] %v2256
  %2321 = vst [vmem:[%s3 + $0x178] sm:$0xff] %v2257
  %2322 = vst [vmem:[%s3 + $0x180] sm:$0xff] %v2258
  %2323 = vst [vmem:[%s3 + $0x188] sm:$0xff] %v2259
  %2324 = vst [vmem:[%s3 + $0x190] sm:$0xff] %v2260
  %2325 = vst [vmem:[%s3 + $0x198] sm:$0xff] %v2261
  %2326 = vst [vmem:[%s3 + $0x1a0] sm:$0xff] %v2262
  %2327 = vst [vmem:[%s3 + $0x1a8] sm:$0xff] %v2263
  %2328 = vst [vmem:[%s3 + $0x1b0] sm:$0xff] %v2264
  %2329 = vst [vmem:[%s3 + $0x1b8] sm:$0xff] %v2265
  %2330 = vst [vmem:[%s3 + $0x1c0] sm:$0xff] %v2266
  %2331 = vst [vmem:[%s3 + $0x1c8] sm:$0xff] %v2267
  %2332 = vst [vmem:[%s3 + $0x1d0] sm:$0xff] %v2268
  %2333 = vst [vmem:[%s3 + $0x1d8] sm:$0xff] %v2269
  %2334 = vst [vmem:[%s3 + $0x1e0] sm:$0xff] %v2270
  %2335 = vst [vmem:[%s3 + $0x1e8] sm:$0xff] %v2271
  %2336 = vst [vmem:[%s3 + $0x1f0] sm:$0xff] %v2272
  %2337 = vst [vmem:[%s3 + $0x1f8] sm:$0xff] %v2273
  // Predicated region
  $region14: #{model_forward.1} parent=0 // pred_check
    _
  $region15: #{model_forward.1} parent=0 // pred_check_branch
    %2339 = sbr.rel (0) target = $region17
  $region16: #{model_forward.1} parent=0 // pred_region
    _
  $region17: #{model_forward.1} parent=0 // pred_fallthru
    _
  // Predicated region
  $region18: #{model_forward.1} parent=0 // pred_check
    _
  $region19: #{model_forward.1} parent=0 // pred_check_branch
    %2341 = sbr.rel (0) target = $region21
  $region20: #{model_forward.1} parent=0 // pred_region
    _
  $region21: #{model_forward.1} parent=0 // pred_fallthru
    _

</llo_original>
